<compile_context>
chip_gen: v6e
topology: v6e:2x2x1
jax: 0.10.0
libtpu: 0.0.40
codegen_flags: <defaults>
</compile_context>

<pallas_src>
import functools

import jax
import jax.numpy as jnp
import numpy as np
from jax.experimental import pallas as pl
from jax.experimental.pallas import tpu as pltpu


def _round_up(x, m):
    return ((x + m - 1) // m) * m


def _silu(v, dtype):
    v = v.astype(dtype)
    return v * jax.nn.sigmoid(v)


def _softplus(v, dtype):
    # numerically stable softplus
    v = v.astype(dtype)
    return jnp.maximum(v, 0.0) + jnp.log1p(jnp.exp(-jnp.abs(v)))


def _act_dtype():
    """bf16 transcendentals on v6e/v7x (bf16 VPU/EUP), f32 on older chips."""
    try:
        kind = jax.devices()[0].device_kind.lower()
    except Exception:
        return jnp.float32
    return jnp.bfloat16 if ("v6" in kind or "v7" in kind) else jnp.float32


# ------------------------------ Pallas kernel ------------------------------
def mamba3_kernel(x_ref, taps_ref, wa_ref, cl_ref, wc_ref, wo_ref, vec_ref,
                  o_ref, *, d_model, dp, np_state, act_dtype):
    D = d_model
    D2 = 2 * D
    n_blocks = wa_ref.shape[0]
    mm = wa_ref.dtype                       # matmul-input dtype (bf16)

    h = x_ref[...]                          # (TM, D) f32 activations (row tile)
    taps = taps_ref[...]                    # (TM, 4*n_blocks) per-row conv taps

    for blk in range(n_blocks):             # 3 fused MambaBlocks (unrolled)
        vec = vec_ref[blk]                  # (4, W) f32 bias slab, zero padded
        b_a = vec[0:1, :8 * D]              # fused (D -> 8D) projection bias
        cl_b = vec[1:2, :D2]                # conv_linear bias
        b_c = vec[2:3, :dp + 2 * np_state]  # [fc1_b | fc2_b | fc3_b] (padded)
        out_b = vec[3:4, :D]                # out_proj bias

        # RMSNorm (eps = 1e-5); weight already folded into wa host-side.
        ms = jnp.mean(h * h, axis=-1, keepdims=True)
        xn = (h * jax.lax.rsqrt(ms + 1e-5)).astype(mm)

        # Fused projection: xn @ [inp_W | inp_W@S_prev | inp_W@S_next | D_W]
        # -> x_proj, its left/right feature shifts (zero padded), D branch.
        ya = jnp.dot(xn, wa_ref[blk], preferred_element_type=jnp.float32) + b_a
        xp = ya[:, 0 * D2:1 * D2]
        prev = ya[:, 1 * D2:2 * D2]
        nxt = ya[:, 2 * D2:3 * D2]
        xr = ya[:, 3 * D2:4 * D2]

        # grouped Conv1d(seq_len, seq_len, k=3, pad=1, groups=seq_len):
        # per-row 3-tap filter over the feature axis (shifts folded above).
        t0 = taps[:, 4 * blk + 0:4 * blk + 1]
        t1 = taps[:, 4 * blk + 1:4 * blk + 2]
        t2 = taps[:, 4 * blk + 2:4 * blk + 3]
        tb = taps[:, 4 * blk + 3:4 * blk + 4]
        xc = _silu(t0 * prev + t1 * xp + t2 * nxt + tb, act_dtype)

        # conv_linear: 2D -> 2D
        xcl = jnp.dot(xc.astype(mm), cl_ref[blk],
                      preferred_element_type=jnp.float32) + cl_b

        # S6 with merged fc1|fc2|fc3 matmul (fc2/fc3 zero-padded to 128 lanes).
        # h starts at zero, so the dA*h term drops: y = x * delta * <B, C>.
        s6 = jnp.dot(xcl.astype(mm), wc_ref[blk],
                     preferred_element_type=jnp.float32) + b_c
        delta = _softplus(s6[:, :D2], act_dtype)
        Bm = s6[:, dp:dp + np_state]
        Cm = s6[:, dp + np_state:dp + 2 * np_state]
        bc = jnp.sum(Bm * Cm, axis=-1, keepdims=True)          # (TM, 1)
        y = xcl * delta.astype(jnp.float32) * bc

        comb = _silu(y, act_dtype) * _silu(xr, act_dtype)
        h = jnp.dot(comb.astype(mm), wo_ref[blk],
                    preferred_element_type=jnp.float32) + out_b

    o_ref[...] = h.astype(o_ref.dtype)


# ------------------------------ host-side packing ------------------------------
def pack_params(params_list, weight_dtype=jnp.bfloat16):
    """Merge / stack the 3 blocks' parameters (leading axis = block)."""
    D = params_list[0]['inp_W'].shape[0]
    D2 = 2 * D
    N = params_list[0]['fc2_W'].shape[1]
    DP = _round_up(D2, 128)                 # padded fc1 output width
    NP = _round_up(N, 128)                  # padded fc2/fc3 output widths
    W8 = 8 * D
    WCC = DP + 2 * NP
    WV = _round_up(max(W8, WCC), 128)       # bias-slab width

    # Feature-shift matrices (exact 0/1 shift-with-zero-pad matrices).
    s_prev = jnp.eye(D2, k=1, dtype=jnp.float32)    # (x @ s_prev)[:, j] = x[:, j-1]
    s_next = jnp.eye(D2, k=-1, dtype=jnp.float32)   # (x @ s_next)[:, j] = x[:, j+1]

    def pad_cols(a, w):
        return jnp.pad(a, ((0, 0), (0, w - a.shape[1])))

    wa, cl, wc, wo, vec, conv = [], [], [], [], [], []
    for p in params_list:
        inp_W, inp_b = p['inp_W'], p['inp_b']
        gw = p['norm_w'][0][:, None]        # fold RMSNorm weight: diag(g) @ W
        wa.append(gw * jnp.concatenate(
            [inp_W, inp_W @ s_prev, inp_W @ s_next, p['D_W']], axis=1))       # (D, 8D)
        b_a = jnp.concatenate(
            [inp_b, inp_b @ s_prev, inp_b @ s_next, p['D_b']], axis=1)        # (1, 8D)
        cl.append(p['cl_W'])                                                  # (2D, 2D)
        wc.append(jnp.concatenate(
            [pad_cols(p['fc1_W'], DP), pad_cols(p['fc2_W'], NP),
             pad_cols(p['fc3_W'], NP)], axis=1))                              # (2D, WCC)
        b_c = jnp.concatenate(
            [pad_cols(p['fc1_b'], DP), pad_cols(p['fc2_b'], NP),
             pad_cols(p['fc3_b'], NP)], axis=1)                               # (1, WCC)
        wo.append(p['out_W'])                                                 # (2D, D)
        conv.append(jnp.concatenate([p['conv_w'], p['conv_b']], axis=1))      # (L, 4)
        vec.append(jnp.stack(
            [pad_cols(b_a, WV)[0], pad_cols(p['cl_b'], WV)[0],
             pad_cols(b_c, WV)[0], pad_cols(p['out_b'], WV)[0]], axis=0))     # (4, WV)

    return dict(
        wa=jnp.stack(wa).astype(weight_dtype),
        cl=jnp.stack(cl).astype(weight_dtype),
        wc=jnp.stack(wc).astype(weight_dtype),
        wo=jnp.stack(wo).astype(weight_dtype),
        vec=jnp.stack(vec).astype(jnp.float32),       # biases stay f32
        conv=jnp.stack(conv).astype(jnp.float32),     # (n_blk, L, 4)
    )


def _choose_row_tile(M):
    # Large row tiles keep the MXU busy and amortize per-step overhead, but
    # keep >= 2 grid steps when possible so both v7x TensorCores get work.
    if M >= 1024:
        return 512
    if M >= 512:
        return 256
    half = _round_up(max(M // 2, 8), 8)
    return min(half, _round_up(M, 8))


# ------------------------------ wrapper ------------------------------
def mamba_forward(x, packed):
    B, L, D = x.shape
    D2 = 2 * D
    n_blk = packed['wa'].shape[0]
    DP = _round_up(D2, 128)
    NP = (packed['wc'].shape[-1] - DP) // 2

    M = B * L
    TM = _choose_row_tile(M)
    M_pad = _round_up(M, TM)

    # Flatten (B, L) -> M rows; zero-pad to a multiple of the row tile.
    x_rows = x.reshape(M, D)
    if M_pad != M:
        x_rows = jnp.pad(x_rows, ((0, M_pad - M), (0, 0)))

    # Per-row conv taps for all blocks: (M_pad, 4*n_blk), block-major columns.
    taps = jnp.transpose(packed['conv'], (1, 0, 2)).reshape(L, 4 * n_blk)
    taps = jnp.broadcast_to(taps[None], (B, L, 4 * n_blk)).reshape(M, 4 * n_blk)
    if M_pad != M:
        taps = jnp.pad(taps, ((0, M_pad - M), (0, 0)))

    ws = [packed[n] for n in ('wa', 'cl', 'wc', 'wo', 'vec')]
    # All 3 blocks' weights stay VMEM-resident (constant index_map).
    # TODO(synk): at large D on v7x, stream one block's weights per grid step
    # (inner 'arbitrary' block axis) / single-buffer them to stay in 64 MiB.
    w_specs = [pl.BlockSpec(w.shape, lambda i: (0, 0, 0)) for w in ws]

    flops = 2 * M * n_blk * (D * 8 * D + D2 * D2 + D2 * (DP + 2 * NP) + D2 * D)
    transcendentals = M * n_blk * 5 * D2
    bytes_accessed = (2 * M_pad * D * 4 + taps.size * 4
                      + sum(int(w.size) * w.dtype.itemsize for w in ws))

    kernel = functools.partial(mamba3_kernel, d_model=D, dp=DP, np_state=NP,
                               act_dtype=_act_dtype())

    out = pl.pallas_call(
        kernel,
        out_shape=jax.ShapeDtypeStruct((M_pad, D), x.dtype),
        grid_spec=pltpu.PrefetchScalarGridSpec(
            num_scalar_prefetch=0,
            grid=(M_pad // TM,),
            in_specs=[pl.BlockSpec((TM, D), lambda i: (i, 0)),
                      pl.BlockSpec((TM, 4 * n_blk), lambda i: (i, 0))] + w_specs,
            out_specs=pl.BlockSpec((TM, D), lambda i: (i, 0)),
        ),
        compiler_params=pltpu.CompilerParams(
            dimension_semantics=("parallel",),
            vmem_limit_bytes=48 * 1024 * 1024,
        ),
        cost_estimate=pl.CostEstimate(flops=flops,
                                      transcendentals=transcendentals,
                                      bytes_accessed=bytes_accessed),
    )(x_rows, taps, *ws)

    return out[:M].reshape(B, L, D)


# ------------------------------ params ------------------------------
def init_block_params(key, L, D, N):
    D2 = 2 * D
    ks = jax.random.split(key, 15)
    s = 0.1
    p = {}
    p['norm_w'] = jnp.ones((1, D), jnp.float32)                       # RMSNorm weight
    p['inp_W'] = jax.random.normal(ks[0], (D, D2), jnp.float32) * s
    p['inp_b'] = jax.random.normal(ks[1], (1, D2), jnp.float32) * s
    p['conv_w'] = jax.random.normal(ks[2], (L, 3), jnp.float32) * s   # Conv1d (L,1,3)
    p['conv_b'] = jax.random.normal(ks[3], (L, 1), jnp.float32) * s
    p['cl_W'] = jax.random.normal(ks[4], (D2, D2), jnp.float32) * s
    p['cl_b'] = jax.random.normal(ks[5], (1, D2), jnp.float32) * s
    p['fc1_W'] = jax.random.normal(ks[6], (D2, D2), jnp.float32) * s
    p['fc1_b'] = jax.random.normal(ks[7], (1, D2), jnp.float32) * s
    p['fc2_W'] = jax.random.normal(ks[8], (D2, N), jnp.float32) * s
    p['fc2_b'] = jax.random.normal(ks[9], (1, N), jnp.float32) * s
    p['fc3_W'] = jax.random.normal(ks[10], (D2, N), jnp.float32) * s
    p['fc3_b'] = jax.random.normal(ks[11], (1, N), jnp.float32) * s
    p['D_W'] = jax.random.normal(ks[12], (D, D2), jnp.float32) * s
    p['D_b'] = jax.random.normal(ks[13], (1, D2), jnp.float32) * s
    p['out_W'] = jax.random.normal(ks[14], (D2, D), jnp.float32) * s
    p['out_b'] = jnp.ones((1, D), jnp.float32)                        # out_proj.bias = 1.0
    # S6.A is never needed: with h initialized to zero, exp(delta.A)*h == 0 exactly.
    return p


# ------------------------------ pure-JAX reference ------------------------------
def mamba_block_ref(x, p):
    ms = jnp.mean(x * x, axis=-1, keepdims=True)
    xn = x * jax.lax.rsqrt(ms + 1e-5) * p['norm_w'][0]
    xp = xn @ p['inp_W'] + p['inp_b'][0]
    prev = jnp.pad(xp[:, :, :-1], ((0, 0), (0, 0), (1, 0)))
    nxt = jnp.pad(xp[:, :, 1:], ((0, 0), (0, 0), (0, 1)))
    w0 = p['conv_w'][:, 0][None, :, None]
    w1 = p['conv_w'][:, 1][None, :, None]
    w2 = p['conv_w'][:, 2][None, :, None]
    cb = p['conv_b'][:, 0][None, :, None]
    xc = (w0 * prev + w1 * xp + w2 * nxt + cb)
    xc = xc * jax.nn.sigmoid(xc)
    xcl = xc @ p['cl_W'] + p['cl_b'][0]
    Bm = xcl @ p['fc2_W'] + p['fc2_b'][0]
    Cm = xcl @ p['fc3_W'] + p['fc3_b'][0]
    d_in = xcl @ p['fc1_W'] + p['fc1_b'][0]
    delta = jnp.maximum(d_in, 0.0) + jnp.log1p(jnp.exp(-jnp.abs(d_in)))
    y = xcl * delta * jnp.sum(Bm * Cm, axis=-1, keepdims=True)
    xr_in = xn @ p['D_W'] + p['D_b'][0]
    xr = xr_in * jax.nn.sigmoid(xr_in)
    ya = y * jax.nn.sigmoid(y)
    return (ya * xr) @ p['out_W'] + p['out_b'][0]


if __name__ == "__main__":
    batch, seq_len, d_model, state_size = 2, 8, 64, 16
    key = jax.random.PRNGKey(0)
    kx, kp = jax.random.split(key)
    x = jax.random.normal(kx, (batch, seq_len, d_model), jnp.float32)
    params = [init_block_params(k, seq_len, d_model, state_size)
              for k in jax.random.split(kp, 3)]
    packed = pack_params(params)

    out = jax.jit(mamba_forward)(x, packed)
    out = jax.block_until_ready(out)

    ref = x
    for p in params:
        ref = mamba_block_ref(ref, p)
    # bf16 weights / MXU inputs vs. a pure-f32 reference -> relaxed tolerance.
    np.testing.assert_allclose(np.asarray(out), np.asarray(ref), rtol=5e-2, atol=5e-2)
    print("KERNEL_OK")
</pallas_src>

<mosaic_0001>
module attributes {stable_mosaic.version = 11 : i64} {
  func.func @mamba3_kernel(%arg0: i32, %arg1: memref<8x64xf32, #tpu.memory_space<vmem>>, %arg2: memref<8x12xf32, #tpu.memory_space<vmem>>, %arg3: memref<3x64x512xbf16, #tpu.memory_space<vmem>>, %arg4: memref<3x128x128xbf16, #tpu.memory_space<vmem>>, %arg5: memref<3x128x384xbf16, #tpu.memory_space<vmem>>, %arg6: memref<3x128x64xbf16, #tpu.memory_space<vmem>>, %arg7: memref<3x4x512xf32, #tpu.memory_space<vmem>>, %arg8: memref<8x64xf32, #tpu.memory_space<vmem>>) attributes {dimension_semantics = [#tpu.dimension_semantics<parallel>], iteration_bounds = array<i64: 2>, scalar_prefetch = 0 : i64, scratch_operands = 0 : i64, tpu.core_type = #tpu.core_type<tc>, window_params = [{transform_indices = @transform_0, window_bounds = array<i64: 8, 64>}, {transform_indices = @transform_1, window_bounds = array<i64: 8, 12>}, {pipeline_mode = #tpu.pipeline_mode<synchronous>, transform_indices = @transform_2, window_bounds = array<i64: 3, 64, 512>}, {pipeline_mode = #tpu.pipeline_mode<synchronous>, transform_indices = @transform_3, window_bounds = array<i64: 3, 128, 128>}, {pipeline_mode = #tpu.pipeline_mode<synchronous>, transform_indices = @transform_4, window_bounds = array<i64: 3, 128, 384>}, {pipeline_mode = #tpu.pipeline_mode<synchronous>, transform_indices = @transform_5, window_bounds = array<i64: 3, 128, 64>}, {pipeline_mode = #tpu.pipeline_mode<synchronous>, transform_indices = @transform_6, window_bounds = array<i64: 3, 4, 512>}, {transform_indices = @transform_7, window_bounds = array<i64: 8, 64>}]} {
    %c0 = arith.constant 0 : index
    %c0_0 = arith.constant 0 : index
    %0 = vector.load %arg1[%c0, %c0_0] : memref<8x64xf32, #tpu.memory_space<vmem>>, vector<8x64xf32>
    %c0_1 = arith.constant 0 : index
    %c0_2 = arith.constant 0 : index
    %1 = vector.load %arg2[%c0_1, %c0_2] : memref<8x12xf32, #tpu.memory_space<vmem>>, vector<8x12xf32>
    %c0_3 = arith.constant 0 : index
    %c0_4 = arith.constant 0 : index
    %c0_5 = arith.constant 0 : index
    %2 = vector.load %arg7[%c0_3, %c0_4, %c0_5] : memref<3x4x512xf32, #tpu.memory_space<vmem>>, vector<1x4x512xf32>
    %3 = vector.shape_cast %2 : vector<1x4x512xf32> to vector<4x512xf32>
    %4 = vector.extract_strided_slice %3 {offsets = [0, 0], sizes = [1, 512], strides = [1, 1]} : vector<4x512xf32> to vector<1x512xf32>
    %5 = vector.extract_strided_slice %3 {offsets = [1, 0], sizes = [1, 128], strides = [1, 1]} : vector<4x512xf32> to vector<1x128xf32>
    %6 = vector.extract_strided_slice %3 {offsets = [2, 0], sizes = [1, 384], strides = [1, 1]} : vector<4x512xf32> to vector<1x384xf32>
    %7 = vector.extract_strided_slice %3 {offsets = [3, 0], sizes = [1, 64], strides = [1, 1]} : vector<4x512xf32> to vector<1x64xf32>
    %8 = arith.mulf %0, %0 : vector<8x64xf32>
    %cst = arith.constant dense<0.000000e+00> : vector<8xf32>
    %9 = vector.multi_reduction <add>, %8, %cst [1] : vector<8x64xf32> to vector<8xf32>
    %10 = vector.shape_cast %9 : vector<8xf32> to vector<8x1xf32>
    %cst_6 = arith.constant 6.400000e+01 : f32
    %11 = vector.broadcast %cst_6 : f32 to vector<8x1xf32>
    %12 = arith.divf %10, %11 : vector<8x1xf32>
    %cst_7 = arith.constant 9.99999974E-6 : f32
    %13 = vector.broadcast %cst_7 : f32 to vector<8x1xf32>
    %14 = arith.addf %12, %13 : vector<8x1xf32>
    %15 = math.rsqrt %14 : vector<8x1xf32>
    %16 = vector.broadcast %15 : vector<8x1xf32> to vector<8x64xf32>
    %17 = arith.mulf %0, %16 : vector<8x64xf32>
    %18 = arith.truncf %17 : vector<8x64xf32> to vector<8x64xbf16>
    %c0_8 = arith.constant 0 : index
    %c0_9 = arith.constant 0 : index
    %c0_10 = arith.constant 0 : index
    %19 = vector.load %arg3[%c0_8, %c0_9, %c0_10] : memref<3x64x512xbf16, #tpu.memory_space<vmem>>, vector<1x64x512xbf16>
    %20 = vector.shape_cast %19 : vector<1x64x512xbf16> to vector<64x512xbf16>
    %cst_11 = arith.constant dense<0.000000e+00> : vector<8x512xf32>
    %21 = tpu.matmul %18, %20, %cst_11 {dimension_numbers = #tpu.dot_dimension_numbers<[1], [0], [0], [1], [0, 0, 1, 1], [], []>} : vector<8x64xbf16>, vector<64x512xbf16>, vector<8x512xf32> -> vector<8x512xf32>
    %22 = vector.broadcast %4 : vector<1x512xf32> to vector<8x512xf32>
    %23 = arith.addf %21, %22 : vector<8x512xf32>
    %24 = vector.extract_strided_slice %23 {offsets = [0, 0], sizes = [8, 128], strides = [1, 1]} : vector<8x512xf32> to vector<8x128xf32>
    %25 = vector.extract_strided_slice %23 {offsets = [0, 128], sizes = [8, 128], strides = [1, 1]} : vector<8x512xf32> to vector<8x128xf32>
    %26 = vector.extract_strided_slice %23 {offsets = [0, 256], sizes = [8, 128], strides = [1, 1]} : vector<8x512xf32> to vector<8x128xf32>
    %27 = vector.extract_strided_slice %23 {offsets = [0, 384], sizes = [8, 128], strides = [1, 1]} : vector<8x512xf32> to vector<8x128xf32>
    %28 = vector.extract_strided_slice %1 {offsets = [0, 0], sizes = [8, 1], strides = [1, 1]} : vector<8x12xf32> to vector<8x1xf32>
    %29 = vector.extract_strided_slice %1 {offsets = [0, 1], sizes = [8, 1], strides = [1, 1]} : vector<8x12xf32> to vector<8x1xf32>
    %30 = vector.extract_strided_slice %1 {offsets = [0, 2], sizes = [8, 1], strides = [1, 1]} : vector<8x12xf32> to vector<8x1xf32>
    %31 = vector.extract_strided_slice %1 {offsets = [0, 3], sizes = [8, 1], strides = [1, 1]} : vector<8x12xf32> to vector<8x1xf32>
    %32 = vector.broadcast %28 : vector<8x1xf32> to vector<8x128xf32>
    %33 = arith.mulf %32, %25 : vector<8x128xf32>
    %34 = vector.broadcast %29 : vector<8x1xf32> to vector<8x128xf32>
    %35 = arith.mulf %34, %24 : vector<8x128xf32>
    %36 = arith.addf %33, %35 : vector<8x128xf32>
    %37 = vector.broadcast %30 : vector<8x1xf32> to vector<8x128xf32>
    %38 = arith.mulf %37, %26 : vector<8x128xf32>
    %39 = arith.addf %36, %38 : vector<8x128xf32>
    %40 = vector.broadcast %31 : vector<8x1xf32> to vector<8x128xf32>
    %41 = arith.addf %39, %40 : vector<8x128xf32>
    %42 = arith.negf %41 : vector<8x128xf32>
    %43 = math.exp %42 : vector<8x128xf32>
    %cst_12 = arith.constant 1.000000e+00 : f32
    %44 = vector.broadcast %cst_12 : f32 to vector<8x128xf32>
    %45 = arith.addf %44, %43 : vector<8x128xf32>
    %46 = arith.divf %44, %45 : vector<8x128xf32>
    %47 = arith.mulf %41, %46 : vector<8x128xf32>
    %48 = arith.truncf %47 : vector<8x128xf32> to vector<8x128xbf16>
    %c0_13 = arith.constant 0 : index
    %c0_14 = arith.constant 0 : index
    %c0_15 = arith.constant 0 : index
    %49 = vector.load %arg4[%c0_13, %c0_14, %c0_15] : memref<3x128x128xbf16, #tpu.memory_space<vmem>>, vector<1x128x128xbf16>
    %50 = vector.shape_cast %49 : vector<1x128x128xbf16> to vector<128x128xbf16>
    %cst_16 = arith.constant dense<0.000000e+00> : vector<8x128xf32>
    %51 = tpu.matmul %48, %50, %cst_16 {dimension_numbers = #tpu.dot_dimension_numbers<[1], [0], [0], [1], [0, 0, 1, 1], [], []>} : vector<8x128xbf16>, vector<128x128xbf16>, vector<8x128xf32> -> vector<8x128xf32>
    %52 = vector.broadcast %5 : vector<1x128xf32> to vector<8x128xf32>
    %53 = arith.addf %51, %52 : vector<8x128xf32>
    %54 = arith.truncf %53 : vector<8x128xf32> to vector<8x128xbf16>
    %c0_17 = arith.constant 0 : index
    %c0_18 = arith.constant 0 : index
    %c0_19 = arith.constant 0 : index
    %55 = vector.load %arg5[%c0_17, %c0_18, %c0_19] : memref<3x128x384xbf16, #tpu.memory_space<vmem>>, vector<1x128x384xbf16>
    %56 = vector.shape_cast %55 : vector<1x128x384xbf16> to vector<128x384xbf16>
    %cst_20 = arith.constant dense<0.000000e+00> : vector<8x384xf32>
    %57 = tpu.matmul %54, %56, %cst_20 {dimension_numbers = #tpu.dot_dimension_numbers<[1], [0], [0], [1], [0, 0, 1, 1], [], []>} : vector<8x128xbf16>, vector<128x384xbf16>, vector<8x384xf32> -> vector<8x384xf32>
    %58 = vector.broadcast %6 : vector<1x384xf32> to vector<8x384xf32>
    %59 = arith.addf %57, %58 : vector<8x384xf32>
    %60 = vector.extract_strided_slice %59 {offsets = [0, 0], sizes = [8, 128], strides = [1, 1]} : vector<8x384xf32> to vector<8x128xf32>
    %cst_21 = arith.constant 0.000000e+00 : f32
    %61 = vector.broadcast %cst_21 : f32 to vector<8x128xf32>
    %62 = arith.maximumf %60, %61 : vector<8x128xf32>
    %63 = math.absf %60 : vector<8x128xf32>
    %cst_22 = arith.constant 0.000000e+00 : f32
    %64 = vector.broadcast %cst_22 : f32 to vector<8x128xf32>
    %65 = arith.subf %64, %63 : vector<8x128xf32>
    %66 = math.exp %65 : vector<8x128xf32>
    %67 = math.log1p %66 : vector<8x128xf32>
    %68 = arith.addf %62, %67 : vector<8x128xf32>
    %69 = vector.extract_strided_slice %59 {offsets = [0, 128], sizes = [8, 128], strides = [1, 1]} : vector<8x384xf32> to vector<8x128xf32>
    %70 = vector.extract_strided_slice %59 {offsets = [0, 256], sizes = [8, 128], strides = [1, 1]} : vector<8x384xf32> to vector<8x128xf32>
    %71 = arith.mulf %69, %70 : vector<8x128xf32>
    %cst_23 = arith.constant dense<0.000000e+00> : vector<8xf32>
    %72 = vector.multi_reduction <add>, %71, %cst_23 [1] : vector<8x128xf32> to vector<8xf32>
    %73 = vector.shape_cast %72 : vector<8xf32> to vector<8x1xf32>
    %74 = arith.mulf %53, %68 : vector<8x128xf32>
    %75 = vector.broadcast %73 : vector<8x1xf32> to vector<8x128xf32>
    %76 = arith.mulf %74, %75 : vector<8x128xf32>
    %77 = arith.negf %76 : vector<8x128xf32>
    %78 = math.exp %77 : vector<8x128xf32>
    %cst_24 = arith.constant 1.000000e+00 : f32
    %79 = vector.broadcast %cst_24 : f32 to vector<8x128xf32>
    %80 = arith.addf %79, %78 : vector<8x128xf32>
    %81 = arith.divf %79, %80 : vector<8x128xf32>
    %82 = arith.mulf %76, %81 : vector<8x128xf32>
    %83 = arith.negf %27 : vector<8x128xf32>
    %84 = math.exp %83 : vector<8x128xf32>
    %cst_25 = arith.constant 1.000000e+00 : f32
    %85 = vector.broadcast %cst_25 : f32 to vector<8x128xf32>
    %86 = arith.addf %85, %84 : vector<8x128xf32>
    %87 = arith.divf %85, %86 : vector<8x128xf32>
    %88 = arith.mulf %27, %87 : vector<8x128xf32>
    %89 = arith.mulf %82, %88 : vector<8x128xf32>
    %90 = arith.truncf %89 : vector<8x128xf32> to vector<8x128xbf16>
    %c0_26 = arith.constant 0 : index
    %c0_27 = arith.constant 0 : index
    %c0_28 = arith.constant 0 : index
    %91 = vector.load %arg6[%c0_26, %c0_27, %c0_28] : memref<3x128x64xbf16, #tpu.memory_space<vmem>>, vector<1x128x64xbf16>
    %92 = vector.shape_cast %91 : vector<1x128x64xbf16> to vector<128x64xbf16>
    %cst_29 = arith.constant dense<0.000000e+00> : vector<8x64xf32>
    %93 = tpu.matmul %90, %92, %cst_29 {dimension_numbers = #tpu.dot_dimension_numbers<[1], [0], [0], [1], [0, 0, 1, 1], [], []>} : vector<8x128xbf16>, vector<128x64xbf16>, vector<8x64xf32> -> vector<8x64xf32>
    %94 = vector.broadcast %7 : vector<1x64xf32> to vector<8x64xf32>
    %95 = arith.addf %93, %94 : vector<8x64xf32>
    %c1 = arith.constant 1 : index
    %c0_30 = arith.constant 0 : index
    %c0_31 = arith.constant 0 : index
    %96 = vector.load %arg7[%c1, %c0_30, %c0_31] : memref<3x4x512xf32, #tpu.memory_space<vmem>>, vector<1x4x512xf32>
    %97 = vector.shape_cast %96 : vector<1x4x512xf32> to vector<4x512xf32>
    %98 = vector.extract_strided_slice %97 {offsets = [0, 0], sizes = [1, 512], strides = [1, 1]} : vector<4x512xf32> to vector<1x512xf32>
    %99 = vector.extract_strided_slice %97 {offsets = [1, 0], sizes = [1, 128], strides = [1, 1]} : vector<4x512xf32> to vector<1x128xf32>
    %100 = vector.extract_strided_slice %97 {offsets = [2, 0], sizes = [1, 384], strides = [1, 1]} : vector<4x512xf32> to vector<1x384xf32>
    %101 = vector.extract_strided_slice %97 {offsets = [3, 0], sizes = [1, 64], strides = [1, 1]} : vector<4x512xf32> to vector<1x64xf32>
    %102 = arith.mulf %95, %95 : vector<8x64xf32>
    %cst_32 = arith.constant dense<0.000000e+00> : vector<8xf32>
    %103 = vector.multi_reduction <add>, %102, %cst_32 [1] : vector<8x64xf32> to vector<8xf32>
    %104 = vector.shape_cast %103 : vector<8xf32> to vector<8x1xf32>
    %cst_33 = arith.constant 6.400000e+01 : f32
    %105 = vector.broadcast %cst_33 : f32 to vector<8x1xf32>
    %106 = arith.divf %104, %105 : vector<8x1xf32>
    %cst_34 = arith.constant 9.99999974E-6 : f32
    %107 = vector.broadcast %cst_34 : f32 to vector<8x1xf32>
    %108 = arith.addf %106, %107 : vector<8x1xf32>
    %109 = math.rsqrt %108 : vector<8x1xf32>
    %110 = vector.broadcast %109 : vector<8x1xf32> to vector<8x64xf32>
    %111 = arith.mulf %95, %110 : vector<8x64xf32>
    %112 = arith.truncf %111 : vector<8x64xf32> to vector<8x64xbf16>
    %c1_35 = arith.constant 1 : index
    %c0_36 = arith.constant 0 : index
    %c0_37 = arith.constant 0 : index
    %113 = vector.load %arg3[%c1_35, %c0_36, %c0_37] : memref<3x64x512xbf16, #tpu.memory_space<vmem>>, vector<1x64x512xbf16>
    %114 = vector.shape_cast %113 : vector<1x64x512xbf16> to vector<64x512xbf16>
    %cst_38 = arith.constant dense<0.000000e+00> : vector<8x512xf32>
    %115 = tpu.matmul %112, %114, %cst_38 {dimension_numbers = #tpu.dot_dimension_numbers<[1], [0], [0], [1], [0, 0, 1, 1], [], []>} : vector<8x64xbf16>, vector<64x512xbf16>, vector<8x512xf32> -> vector<8x512xf32>
    %116 = vector.broadcast %98 : vector<1x512xf32> to vector<8x512xf32>
    %117 = arith.addf %115, %116 : vector<8x512xf32>
    %118 = vector.extract_strided_slice %117 {offsets = [0, 0], sizes = [8, 128], strides = [1, 1]} : vector<8x512xf32> to vector<8x128xf32>
    %119 = vector.extract_strided_slice %117 {offsets = [0, 128], sizes = [8, 128], strides = [1, 1]} : vector<8x512xf32> to vector<8x128xf32>
    %120 = vector.extract_strided_slice %117 {offsets = [0, 256], sizes = [8, 128], strides = [1, 1]} : vector<8x512xf32> to vector<8x128xf32>
    %121 = vector.extract_strided_slice %117 {offsets = [0, 384], sizes = [8, 128], strides = [1, 1]} : vector<8x512xf32> to vector<8x128xf32>
    %122 = vector.extract_strided_slice %1 {offsets = [0, 4], sizes = [8, 1], strides = [1, 1]} : vector<8x12xf32> to vector<8x1xf32>
    %123 = vector.extract_strided_slice %1 {offsets = [0, 5], sizes = [8, 1], strides = [1, 1]} : vector<8x12xf32> to vector<8x1xf32>
    %124 = vector.extract_strided_slice %1 {offsets = [0, 6], sizes = [8, 1], strides = [1, 1]} : vector<8x12xf32> to vector<8x1xf32>
    %125 = vector.extract_strided_slice %1 {offsets = [0, 7], sizes = [8, 1], strides = [1, 1]} : vector<8x12xf32> to vector<8x1xf32>
    %126 = vector.broadcast %122 : vector<8x1xf32> to vector<8x128xf32>
    %127 = arith.mulf %126, %119 : vector<8x128xf32>
    %128 = vector.broadcast %123 : vector<8x1xf32> to vector<8x128xf32>
    %129 = arith.mulf %128, %118 : vector<8x128xf32>
    %130 = arith.addf %127, %129 : vector<8x128xf32>
    %131 = vector.broadcast %124 : vector<8x1xf32> to vector<8x128xf32>
    %132 = arith.mulf %131, %120 : vector<8x128xf32>
    %133 = arith.addf %130, %132 : vector<8x128xf32>
    %134 = vector.broadcast %125 : vector<8x1xf32> to vector<8x128xf32>
    %135 = arith.addf %133, %134 : vector<8x128xf32>
    %136 = arith.negf %135 : vector<8x128xf32>
    %137 = math.exp %136 : vector<8x128xf32>
    %cst_39 = arith.constant 1.000000e+00 : f32
    %138 = vector.broadcast %cst_39 : f32 to vector<8x128xf32>
    %139 = arith.addf %138, %137 : vector<8x128xf32>
    %140 = arith.divf %138, %139 : vector<8x128xf32>
    %141 = arith.mulf %135, %140 : vector<8x128xf32>
    %142 = arith.truncf %141 : vector<8x128xf32> to vector<8x128xbf16>
    %c1_40 = arith.constant 1 : index
    %c0_41 = arith.constant 0 : index
    %c0_42 = arith.constant 0 : index
    %143 = vector.load %arg4[%c1_40, %c0_41, %c0_42] : memref<3x128x128xbf16, #tpu.memory_space<vmem>>, vector<1x128x128xbf16>
    %144 = vector.shape_cast %143 : vector<1x128x128xbf16> to vector<128x128xbf16>
    %cst_43 = arith.constant dense<0.000000e+00> : vector<8x128xf32>
    %145 = tpu.matmul %142, %144, %cst_43 {dimension_numbers = #tpu.dot_dimension_numbers<[1], [0], [0], [1], [0, 0, 1, 1], [], []>} : vector<8x128xbf16>, vector<128x128xbf16>, vector<8x128xf32> -> vector<8x128xf32>
    %146 = vector.broadcast %99 : vector<1x128xf32> to vector<8x128xf32>
    %147 = arith.addf %145, %146 : vector<8x128xf32>
    %148 = arith.truncf %147 : vector<8x128xf32> to vector<8x128xbf16>
    %c1_44 = arith.constant 1 : index
    %c0_45 = arith.constant 0 : index
    %c0_46 = arith.constant 0 : index
    %149 = vector.load %arg5[%c1_44, %c0_45, %c0_46] : memref<3x128x384xbf16, #tpu.memory_space<vmem>>, vector<1x128x384xbf16>
    %150 = vector.shape_cast %149 : vector<1x128x384xbf16> to vector<128x384xbf16>
    %cst_47 = arith.constant dense<0.000000e+00> : vector<8x384xf32>
    %151 = tpu.matmul %148, %150, %cst_47 {dimension_numbers = #tpu.dot_dimension_numbers<[1], [0], [0], [1], [0, 0, 1, 1], [], []>} : vector<8x128xbf16>, vector<128x384xbf16>, vector<8x384xf32> -> vector<8x384xf32>
    %152 = vector.broadcast %100 : vector<1x384xf32> to vector<8x384xf32>
    %153 = arith.addf %151, %152 : vector<8x384xf32>
    %154 = vector.extract_strided_slice %153 {offsets = [0, 0], sizes = [8, 128], strides = [1, 1]} : vector<8x384xf32> to vector<8x128xf32>
    %cst_48 = arith.constant 0.000000e+00 : f32
    %155 = vector.broadcast %cst_48 : f32 to vector<8x128xf32>
    %156 = arith.maximumf %154, %155 : vector<8x128xf32>
    %157 = math.absf %154 : vector<8x128xf32>
    %cst_49 = arith.constant 0.000000e+00 : f32
    %158 = vector.broadcast %cst_49 : f32 to vector<8x128xf32>
    %159 = arith.subf %158, %157 : vector<8x128xf32>
    %160 = math.exp %159 : vector<8x128xf32>
    %161 = math.log1p %160 : vector<8x128xf32>
    %162 = arith.addf %156, %161 : vector<8x128xf32>
    %163 = vector.extract_strided_slice %153 {offsets = [0, 128], sizes = [8, 128], strides = [1, 1]} : vector<8x384xf32> to vector<8x128xf32>
    %164 = vector.extract_strided_slice %153 {offsets = [0, 256], sizes = [8, 128], strides = [1, 1]} : vector<8x384xf32> to vector<8x128xf32>
    %165 = arith.mulf %163, %164 : vector<8x128xf32>
    %cst_50 = arith.constant dense<0.000000e+00> : vector<8xf32>
    %166 = vector.multi_reduction <add>, %165, %cst_50 [1] : vector<8x128xf32> to vector<8xf32>
    %167 = vector.shape_cast %166 : vector<8xf32> to vector<8x1xf32>
    %168 = arith.mulf %147, %162 : vector<8x128xf32>
    %169 = vector.broadcast %167 : vector<8x1xf32> to vector<8x128xf32>
    %170 = arith.mulf %168, %169 : vector<8x128xf32>
    %171 = arith.negf %170 : vector<8x128xf32>
    %172 = math.exp %171 : vector<8x128xf32>
    %cst_51 = arith.constant 1.000000e+00 : f32
    %173 = vector.broadcast %cst_51 : f32 to vector<8x128xf32>
    %174 = arith.addf %173, %172 : vector<8x128xf32>
    %175 = arith.divf %173, %174 : vector<8x128xf32>
    %176 = arith.mulf %170, %175 : vector<8x128xf32>
    %177 = arith.negf %121 : vector<8x128xf32>
    %178 = math.exp %177 : vector<8x128xf32>
    %cst_52 = arith.constant 1.000000e+00 : f32
    %179 = vector.broadcast %cst_52 : f32 to vector<8x128xf32>
    %180 = arith.addf %179, %178 : vector<8x128xf32>
    %181 = arith.divf %179, %180 : vector<8x128xf32>
    %182 = arith.mulf %121, %181 : vector<8x128xf32>
    %183 = arith.mulf %176, %182 : vector<8x128xf32>
    %184 = arith.truncf %183 : vector<8x128xf32> to vector<8x128xbf16>
    %c1_53 = arith.constant 1 : index
    %c0_54 = arith.constant 0 : index
    %c0_55 = arith.constant 0 : index
    %185 = vector.load %arg6[%c1_53, %c0_54, %c0_55] : memref<3x128x64xbf16, #tpu.memory_space<vmem>>, vector<1x128x64xbf16>
    %186 = vector.shape_cast %185 : vector<1x128x64xbf16> to vector<128x64xbf16>
    %cst_56 = arith.constant dense<0.000000e+00> : vector<8x64xf32>
    %187 = tpu.matmul %184, %186, %cst_56 {dimension_numbers = #tpu.dot_dimension_numbers<[1], [0], [0], [1], [0, 0, 1, 1], [], []>} : vector<8x128xbf16>, vector<128x64xbf16>, vector<8x64xf32> -> vector<8x64xf32>
    %188 = vector.broadcast %101 : vector<1x64xf32> to vector<8x64xf32>
    %189 = arith.addf %187, %188 : vector<8x64xf32>
    %c2 = arith.constant 2 : index
    %c0_57 = arith.constant 0 : index
    %c0_58 = arith.constant 0 : index
    %190 = vector.load %arg7[%c2, %c0_57, %c0_58] : memref<3x4x512xf32, #tpu.memory_space<vmem>>, vector<1x4x512xf32>
    %191 = vector.shape_cast %190 : vector<1x4x512xf32> to vector<4x512xf32>
    %192 = vector.extract_strided_slice %191 {offsets = [0, 0], sizes = [1, 512], strides = [1, 1]} : vector<4x512xf32> to vector<1x512xf32>
    %193 = vector.extract_strided_slice %191 {offsets = [1, 0], sizes = [1, 128], strides = [1, 1]} : vector<4x512xf32> to vector<1x128xf32>
    %194 = vector.extract_strided_slice %191 {offsets = [2, 0], sizes = [1, 384], strides = [1, 1]} : vector<4x512xf32> to vector<1x384xf32>
    %195 = vector.extract_strided_slice %191 {offsets = [3, 0], sizes = [1, 64], strides = [1, 1]} : vector<4x512xf32> to vector<1x64xf32>
    %196 = arith.mulf %189, %189 : vector<8x64xf32>
    %cst_59 = arith.constant dense<0.000000e+00> : vector<8xf32>
    %197 = vector.multi_reduction <add>, %196, %cst_59 [1] : vector<8x64xf32> to vector<8xf32>
    %198 = vector.shape_cast %197 : vector<8xf32> to vector<8x1xf32>
    %cst_60 = arith.constant 6.400000e+01 : f32
    %199 = vector.broadcast %cst_60 : f32 to vector<8x1xf32>
    %200 = arith.divf %198, %199 : vector<8x1xf32>
    %cst_61 = arith.constant 9.99999974E-6 : f32
    %201 = vector.broadcast %cst_61 : f32 to vector<8x1xf32>
    %202 = arith.addf %200, %201 : vector<8x1xf32>
    %203 = math.rsqrt %202 : vector<8x1xf32>
    %204 = vector.broadcast %203 : vector<8x1xf32> to vector<8x64xf32>
    %205 = arith.mulf %189, %204 : vector<8x64xf32>
    %206 = arith.truncf %205 : vector<8x64xf32> to vector<8x64xbf16>
    %c2_62 = arith.constant 2 : index
    %c0_63 = arith.constant 0 : index
    %c0_64 = arith.constant 0 : index
    %207 = vector.load %arg3[%c2_62, %c0_63, %c0_64] : memref<3x64x512xbf16, #tpu.memory_space<vmem>>, vector<1x64x512xbf16>
    %208 = vector.shape_cast %207 : vector<1x64x512xbf16> to vector<64x512xbf16>
    %cst_65 = arith.constant dense<0.000000e+00> : vector<8x512xf32>
    %209 = tpu.matmul %206, %208, %cst_65 {dimension_numbers = #tpu.dot_dimension_numbers<[1], [0], [0], [1], [0, 0, 1, 1], [], []>} : vector<8x64xbf16>, vector<64x512xbf16>, vector<8x512xf32> -> vector<8x512xf32>
    %210 = vector.broadcast %192 : vector<1x512xf32> to vector<8x512xf32>
    %211 = arith.addf %209, %210 : vector<8x512xf32>
    %212 = vector.extract_strided_slice %211 {offsets = [0, 0], sizes = [8, 128], strides = [1, 1]} : vector<8x512xf32> to vector<8x128xf32>
    %213 = vector.extract_strided_slice %211 {offsets = [0, 128], sizes = [8, 128], strides = [1, 1]} : vector<8x512xf32> to vector<8x128xf32>
    %214 = vector.extract_strided_slice %211 {offsets = [0, 256], sizes = [8, 128], strides = [1, 1]} : vector<8x512xf32> to vector<8x128xf32>
    %215 = vector.extract_strided_slice %211 {offsets = [0, 384], sizes = [8, 128], strides = [1, 1]} : vector<8x512xf32> to vector<8x128xf32>
    %216 = vector.extract_strided_slice %1 {offsets = [0, 8], sizes = [8, 1], strides = [1, 1]} : vector<8x12xf32> to vector<8x1xf32>
    %217 = vector.extract_strided_slice %1 {offsets = [0, 9], sizes = [8, 1], strides = [1, 1]} : vector<8x12xf32> to vector<8x1xf32>
    %218 = vector.extract_strided_slice %1 {offsets = [0, 10], sizes = [8, 1], strides = [1, 1]} : vector<8x12xf32> to vector<8x1xf32>
    %219 = vector.extract_strided_slice %1 {offsets = [0, 11], sizes = [8, 1], strides = [1, 1]} : vector<8x12xf32> to vector<8x1xf32>
    %220 = vector.broadcast %216 : vector<8x1xf32> to vector<8x128xf32>
    %221 = arith.mulf %220, %213 : vector<8x128xf32>
    %222 = vector.broadcast %217 : vector<8x1xf32> to vector<8x128xf32>
    %223 = arith.mulf %222, %212 : vector<8x128xf32>
    %224 = arith.addf %221, %223 : vector<8x128xf32>
    %225 = vector.broadcast %218 : vector<8x1xf32> to vector<8x128xf32>
    %226 = arith.mulf %225, %214 : vector<8x128xf32>
    %227 = arith.addf %224, %226 : vector<8x128xf32>
    %228 = vector.broadcast %219 : vector<8x1xf32> to vector<8x128xf32>
    %229 = arith.addf %227, %228 : vector<8x128xf32>
    %230 = arith.negf %229 : vector<8x128xf32>
    %231 = math.exp %230 : vector<8x128xf32>
    %cst_66 = arith.constant 1.000000e+00 : f32
    %232 = vector.broadcast %cst_66 : f32 to vector<8x128xf32>
    %233 = arith.addf %232, %231 : vector<8x128xf32>
    %234 = arith.divf %232, %233 : vector<8x128xf32>
    %235 = arith.mulf %229, %234 : vector<8x128xf32>
    %236 = arith.truncf %235 : vector<8x128xf32> to vector<8x128xbf16>
    %c2_67 = arith.constant 2 : index
    %c0_68 = arith.constant 0 : index
    %c0_69 = arith.constant 0 : index
    %237 = vector.load %arg4[%c2_67, %c0_68, %c0_69] : memref<3x128x128xbf16, #tpu.memory_space<vmem>>, vector<1x128x128xbf16>
    %238 = vector.shape_cast %237 : vector<1x128x128xbf16> to vector<128x128xbf16>
    %cst_70 = arith.constant dense<0.000000e+00> : vector<8x128xf32>
    %239 = tpu.matmul %236, %238, %cst_70 {dimension_numbers = #tpu.dot_dimension_numbers<[1], [0], [0], [1], [0, 0, 1, 1], [], []>} : vector<8x128xbf16>, vector<128x128xbf16>, vector<8x128xf32> -> vector<8x128xf32>
    %240 = vector.broadcast %193 : vector<1x128xf32> to vector<8x128xf32>
    %241 = arith.addf %239, %240 : vector<8x128xf32>
    %242 = arith.truncf %241 : vector<8x128xf32> to vector<8x128xbf16>
    %c2_71 = arith.constant 2 : index
    %c0_72 = arith.constant 0 : index
    %c0_73 = arith.constant 0 : index
    %243 = vector.load %arg5[%c2_71, %c0_72, %c0_73] : memref<3x128x384xbf16, #tpu.memory_space<vmem>>, vector<1x128x384xbf16>
    %244 = vector.shape_cast %243 : vector<1x128x384xbf16> to vector<128x384xbf16>
    %cst_74 = arith.constant dense<0.000000e+00> : vector<8x384xf32>
    %245 = tpu.matmul %242, %244, %cst_74 {dimension_numbers = #tpu.dot_dimension_numbers<[1], [0], [0], [1], [0, 0, 1, 1], [], []>} : vector<8x128xbf16>, vector<128x384xbf16>, vector<8x384xf32> -> vector<8x384xf32>
    %246 = vector.broadcast %194 : vector<1x384xf32> to vector<8x384xf32>
    %247 = arith.addf %245, %246 : vector<8x384xf32>
    %248 = vector.extract_strided_slice %247 {offsets = [0, 0], sizes = [8, 128], strides = [1, 1]} : vector<8x384xf32> to vector<8x128xf32>
    %cst_75 = arith.constant 0.000000e+00 : f32
    %249 = vector.broadcast %cst_75 : f32 to vector<8x128xf32>
    %250 = arith.maximumf %248, %249 : vector<8x128xf32>
    %251 = math.absf %248 : vector<8x128xf32>
    %cst_76 = arith.constant 0.000000e+00 : f32
    %252 = vector.broadcast %cst_76 : f32 to vector<8x128xf32>
    %253 = arith.subf %252, %251 : vector<8x128xf32>
    %254 = math.exp %253 : vector<8x128xf32>
    %255 = math.log1p %254 : vector<8x128xf32>
    %256 = arith.addf %250, %255 : vector<8x128xf32>
    %257 = vector.extract_strided_slice %247 {offsets = [0, 128], sizes = [8, 128], strides = [1, 1]} : vector<8x384xf32> to vector<8x128xf32>
    %258 = vector.extract_strided_slice %247 {offsets = [0, 256], sizes = [8, 128], strides = [1, 1]} : vector<8x384xf32> to vector<8x128xf32>
    %259 = arith.mulf %257, %258 : vector<8x128xf32>
    %cst_77 = arith.constant dense<0.000000e+00> : vector<8xf32>
    %260 = vector.multi_reduction <add>, %259, %cst_77 [1] : vector<8x128xf32> to vector<8xf32>
    %261 = vector.shape_cast %260 : vector<8xf32> to vector<8x1xf32>
    %262 = arith.mulf %241, %256 : vector<8x128xf32>
    %263 = vector.broadcast %261 : vector<8x1xf32> to vector<8x128xf32>
    %264 = arith.mulf %262, %263 : vector<8x128xf32>
    %265 = arith.negf %264 : vector<8x128xf32>
    %266 = math.exp %265 : vector<8x128xf32>
    %cst_78 = arith.constant 1.000000e+00 : f32
    %267 = vector.broadcast %cst_78 : f32 to vector<8x128xf32>
    %268 = arith.addf %267, %266 : vector<8x128xf32>
    %269 = arith.divf %267, %268 : vector<8x128xf32>
    %270 = arith.mulf %264, %269 : vector<8x128xf32>
    %271 = arith.negf %215 : vector<8x128xf32>
    %272 = math.exp %271 : vector<8x128xf32>
    %cst_79 = arith.constant 1.000000e+00 : f32
    %273 = vector.broadcast %cst_79 : f32 to vector<8x128xf32>
    %274 = arith.addf %273, %272 : vector<8x128xf32>
    %275 = arith.divf %273, %274 : vector<8x128xf32>
    %276 = arith.mulf %215, %275 : vector<8x128xf32>
    %277 = arith.mulf %270, %276 : vector<8x128xf32>
    %278 = arith.truncf %277 : vector<8x128xf32> to vector<8x128xbf16>
    %c2_80 = arith.constant 2 : index
    %c0_81 = arith.constant 0 : index
    %c0_82 = arith.constant 0 : index
    %279 = vector.load %arg6[%c2_80, %c0_81, %c0_82] : memref<3x128x64xbf16, #tpu.memory_space<vmem>>, vector<1x128x64xbf16>
    %280 = vector.shape_cast %279 : vector<1x128x64xbf16> to vector<128x64xbf16>
    %cst_83 = arith.constant dense<0.000000e+00> : vector<8x64xf32>
    %281 = tpu.matmul %278, %280, %cst_83 {dimension_numbers = #tpu.dot_dimension_numbers<[1], [0], [0], [1], [0, 0, 1, 1], [], []>} : vector<8x128xbf16>, vector<128x64xbf16>, vector<8x64xf32> -> vector<8x64xf32>
    %282 = vector.broadcast %195 : vector<1x64xf32> to vector<8x64xf32>
    %283 = arith.addf %281, %282 : vector<8x64xf32>
    %c0_84 = arith.constant 0 : index
    %c0_85 = arith.constant 0 : index
    %284 = vector.load %arg8[%c0_84, %c0_85] : memref<8x64xf32, #tpu.memory_space<vmem>>, vector<8x64xf32>
    tpu.vector_store %arg8[%c0_84, %c0_85], %283 {strides = array<i32>} : memref<8x64xf32, #tpu.memory_space<vmem>>, vector<8x64xf32>,
    return
  }
  func.func @transform_0(%arg0: i32) -> (i32, i32) {
    %c0_i32 = arith.constant 0 : i32
    %c0_i32_0 = arith.constant 0 : i32
    return %arg0, %c0_i32 : i32, i32
  }
  func.func @transform_1(%arg0: i32) -> (i32, i32) {
    %c0_i32 = arith.constant 0 : i32
    %c0_i32_0 = arith.constant 0 : i32
    return %arg0, %c0_i32 : i32, i32
  }
  func.func @transform_2(%arg0: i32) -> (i32, i32, i32) {
    %c0_i32 = arith.constant 0 : i32
    %c0_i32_0 = arith.constant 0 : i32
    %c0_i32_1 = arith.constant 0 : i32
    %c0_i32_2 = arith.constant 0 : i32
    return %c0_i32, %c0_i32_0, %c0_i32_1 : i32, i32, i32
  }
  func.func @transform_3(%arg0: i32) -> (i32, i32, i32) {
    %c0_i32 = arith.constant 0 : i32
    %c0_i32_0 = arith.constant 0 : i32
    %c0_i32_1 = arith.constant 0 : i32
    %c0_i32_2 = arith.constant 0 : i32
    return %c0_i32, %c0_i32_0, %c0_i32_1 : i32, i32, i32
  }
  func.func @transform_4(%arg0: i32) -> (i32, i32, i32) {
    %c0_i32 = arith.constant 0 : i32
    %c0_i32_0 = arith.constant 0 : i32
    %c0_i32_1 = arith.constant 0 : i32
    %c0_i32_2 = arith.constant 0 : i32
    return %c0_i32, %c0_i32_0, %c0_i32_1 : i32, i32, i32
  }
  func.func @transform_5(%arg0: i32) -> (i32, i32, i32) {
    %c0_i32 = arith.constant 0 : i32
    %c0_i32_0 = arith.constant 0 : i32
    %c0_i32_1 = arith.constant 0 : i32
    %c0_i32_2 = arith.constant 0 : i32
    return %c0_i32, %c0_i32_0, %c0_i32_1 : i32, i32, i32
  }
  func.func @transform_6(%arg0: i32) -> (i32, i32, i32) {
    %c0_i32 = arith.constant 0 : i32
    %c0_i32_0 = arith.constant 0 : i32
    %c0_i32_1 = arith.constant 0 : i32
    %c0_i32_2 = arith.constant 0 : i32
    return %c0_i32, %c0_i32_0, %c0_i32_1 : i32, i32, i32
  }
  func.func @transform_7(%arg0: i32) -> (i32, i32) {
    %c0_i32 = arith.constant 0 : i32
    %c0_i32_0 = arith.constant 0 : i32
    return %arg0, %c0_i32 : i32, i32
  }
}

</mosaic_0001>

<llo_original>
// kernel: mamba_forward.1
$region0: #{mamba_forward.1}
  #allocation0 [shape = 'u32[]', space=smem, size = 0x4, offset = 0x4, fixed_abs, tag = 'smem constant byte address 0x4 - core index']
  #allocation1 [shape = 'u32[144,128]{1,0:T(1,128)}', space=vmem, size = 0x12000, scoped, tag = 'internal scratch']
  %s0 = inlined_call_operand.vmem [shape: f32[16,64], index: 0, kind: input, shape index: {}]
  %s1 = inlined_call_operand.vmem [shape: f32[16,12], index: 1, kind: input, shape index: {}]
  %s2 = inlined_call_operand.hbm [shape: bf16[3,64,512], index: 2, kind: input, shape index: {}]
  %s3 = inlined_call_operand.vmem [shape: bf16[3,128,128], index: 3, kind: input, shape index: {}]
  %s4 = inlined_call_operand.hbm [shape: bf16[3,128,384], index: 4, kind: input, shape index: {}]
  %s5 = inlined_call_operand.vmem [shape: bf16[3,128,64], index: 5, kind: input, shape index: {}]
  %s6 = inlined_call_operand.vmem [shape: f32[3,4,512], index: 6, kind: input, shape index: {}]
  %s7 = inlined_call_operand.hbm [shape: f32[16,64], index: 7, kind: output, shape index: {}]
  %s8 = sld [smem:[#allocation0]]
  $region69: #{mamba_forward.1} parent=0
    _
  %s10 = ssub.s32 1, %s8
  %s11 = scalar_select 0, %s10, %s8
  $region1: #{mamba_forward.1} parent=0
    #allocation2 [shape = 'u8[196608]{0}', space=vmem, size = 0x30000, scoped, tag = 'input window, operand 2, single buffered']
    #allocation3 [shape = 's32[2]{0}', space=sflag, size = 0x8, scoped, tag = 'scoped memory for mamba_forward.1']
    #allocation4 [shape = 's32[2]{0}', space=sflag, size = 0x8, scoped, tag = 'scoped memory for mamba_forward.1']
    #allocation5 [shape = 'u8[294912]{0}', space=vmem, size = 0x48000, scoped, tag = 'input window, operand 4, single buffered']
    #allocation6 [shape = 's32[1]{0}', space=sflag, size = 0x4, scoped, tag = 'scoped memory for mamba_forward.1']
    #allocation7 [shape = 'u8[8192]{0}', space=vmem, size = 0x2000, scoped, tag = 'output window, operand 0']
    %12 = vsyncpa [#allocation3], 0
    %13 = vsyncpa [#allocation6], 0
    %14 = vsyncpa [#allocation4], 0
    %s15 = scalar_lea.sflag [#allocation4], 1
    %16 = vsyncpa %s15, 0
    loop: start=0, step=1, limit=4
    $region2: #{mamba_forward.1} parent=1 // loop_pre_header
      _
    $region3: #{mamba_forward.1} parent=1 // loop_header
      %s18 = sphi 0, %s22
      %p19 = scmp.ge.s32.totalorder %s18, 4
      %s28 = sphi 0, %s30
      %s31 = sphi 0, %s28
      %s32 = sphi 0, %s31
      %s48 = sphi 0, %s32
      %s54 = sphi 0, %s56
      %s57 = sphi 0, %s54
      %s58 = sphi 0, %s57
      %s74 = sphi 0, %s58
      %s78 = sphi 0, %s78
      %s80 = sphi 0, %s78
      %s81 = sphi 0, %s80
      %s95 = sphi 0, %s81
      %s99 = sphi 0, %s99
      %s101 = sphi 0, %s99
      %s102 = sphi 0, %s101
      %s116 = sphi 0, %s102
      %s120 = sphi 0, %s120
      %s122 = sphi 0, %s120
      %s123 = sphi 0, %s122
      %s137 = sphi 0, %s123
      %s141 = sphi 0, %s141
      %s143 = sphi 0, %s141
      %s144 = sphi 0, %s143
      %s158 = sphi 0, %s144
      %s162 = sphi 0, %s162
      %s164 = sphi 0, %s162
      %s165 = sphi 0, %s164
      %s179 = sphi 0, %s165
      %s185 = sphi 0, %s187
      %s188 = sphi 0, %s185
      %s189 = sphi 0, %s188
      %s205 = sphi 0, %s189
    $region4: #{mamba_forward.1} parent=1 // loop_header_branch
      %21 = sbr.rel (%p19) target = $region8
    $region5: #{mamba_forward.1} parent=1 // loop_body
      %s23 = ssub.s32 %s18, 1
      %s24 = ssub.s32 %s18, 2
      %s25 = sadd.s32 %s18, 1
      %s26 = ssub.s32 %s18, %s25
      %p27 = scmp.eq.s32.totalorder %s26, 0
      %s29 = sadd.s32 %s28, 1
      %s30 = scalar_select %p27, %s28, %s29
      %p33 = pneg %p27
      %p34 = scmp.eq.s32.totalorder %s18, 1
      %p35 = por %p33, %p34
      %p36 = scmp.ne.s32.totalorder %s28, %s31
      %p37 = scmp.eq.s32.totalorder %s18, 0
      %p38 = por %p36, %p37
      %p39 = scmp.ne.s32.totalorder %s28, %s31
      %p40 = scmp.eq.s32.totalorder %s23, 1
      %p41 = por %p39, %p40
      %p42 = scmp.ne.s32.totalorder %s31, %s32
      %p43 = scmp.eq.s32.totalorder %s23, 0
      %p44 = por %p42, %p43
      %p45 = scmp.ne.s32.totalorder %s31, %s32
      %p46 = scmp.eq.s32.totalorder %s24, 1
      %p47 = por %p45, %p46
      %p49 = scmp.ne.s32.totalorder %s32, %s48
      %p50 = scmp.eq.s32.totalorder %s24, 0
      %p51 = por %p49, %p50
      %s52 = ssub.s32 %s18, %s25
      %p53 = scmp.eq.s32.totalorder %s52, 0
      %s55 = sadd.s32 %s54, 1
      %s56 = scalar_select %p53, %s54, %s55
      %p59 = pneg %p53
      %p60 = scmp.eq.s32.totalorder %s18, 1
      %p61 = por %p59, %p60
      %p62 = scmp.ne.s32.totalorder %s54, %s57
      %p63 = scmp.eq.s32.totalorder %s18, 0
      %p64 = por %p62, %p63
      %p65 = scmp.ne.s32.totalorder %s54, %s57
      %p66 = scmp.eq.s32.totalorder %s23, 1
      %p67 = por %p65, %p66
      %p68 = scmp.ne.s32.totalorder %s57, %s58
      %p69 = scmp.eq.s32.totalorder %s23, 0
      %p70 = por %p68, %p69
      %p71 = scmp.ne.s32.totalorder %s57, %s58
      %p72 = scmp.eq.s32.totalorder %s24, 1
      %p73 = por %p71, %p72
      %p75 = scmp.ne.s32.totalorder %s58, %s74
      %p76 = scmp.eq.s32.totalorder %s24, 0
      %p77 = por %p75, %p76
      %s79 = sadd.s32 %s78, 1
      %p82 = scmp.eq.s32.totalorder %s18, 1
      %p83 = scmp.ne.s32.totalorder %s78, %s80
      %p84 = scmp.eq.s32.totalorder %s18, 0
      %p85 = por %p83, %p84
      %p86 = scmp.ne.s32.totalorder %s78, %s80
      %p87 = scmp.eq.s32.totalorder %s23, 1
      %p88 = por %p86, %p87
      %p89 = scmp.ne.s32.totalorder %s80, %s81
      %p90 = scmp.eq.s32.totalorder %s23, 0
      %p91 = por %p89, %p90
      %p92 = scmp.ne.s32.totalorder %s80, %s81
      %p93 = scmp.eq.s32.totalorder %s24, 1
      %p94 = por %p92, %p93
      %p96 = scmp.ne.s32.totalorder %s81, %s95
      %p97 = scmp.eq.s32.totalorder %s24, 0
      %p98 = por %p96, %p97
      %s100 = sadd.s32 %s99, 1
      %p103 = scmp.eq.s32.totalorder %s18, 1
      %p104 = scmp.ne.s32.totalorder %s99, %s101
      %p105 = scmp.eq.s32.totalorder %s18, 0
      %p106 = por %p104, %p105
      %p107 = scmp.ne.s32.totalorder %s99, %s101
      %p108 = scmp.eq.s32.totalorder %s23, 1
      %p109 = por %p107, %p108
      %p110 = scmp.ne.s32.totalorder %s101, %s102
      %p111 = scmp.eq.s32.totalorder %s23, 0
      %p112 = por %p110, %p111
      %p113 = scmp.ne.s32.totalorder %s101, %s102
      %p114 = scmp.eq.s32.totalorder %s24, 1
      %p115 = por %p113, %p114
      %p117 = scmp.ne.s32.totalorder %s102, %s116
      %p118 = scmp.eq.s32.totalorder %s24, 0
      %p119 = por %p117, %p118
      %s121 = sadd.s32 %s120, 1
      %p124 = scmp.eq.s32.totalorder %s18, 1
      %p125 = scmp.ne.s32.totalorder %s120, %s122
      %p126 = scmp.eq.s32.totalorder %s18, 0
      %p127 = por %p125, %p126
      %p128 = scmp.ne.s32.totalorder %s120, %s122
      %p129 = scmp.eq.s32.totalorder %s23, 1
      %p130 = por %p128, %p129
      %p131 = scmp.ne.s32.totalorder %s122, %s123
      %p132 = scmp.eq.s32.totalorder %s23, 0
      %p133 = por %p131, %p132
      %p134 = scmp.ne.s32.totalorder %s122, %s123
      %p135 = scmp.eq.s32.totalorder %s24, 1
      %p136 = por %p134, %p135
      %p138 = scmp.ne.s32.totalorder %s123, %s137
      %p139 = scmp.eq.s32.totalorder %s24, 0
      %p140 = por %p138, %p139
      %s142 = sadd.s32 %s141, 1
      %p145 = scmp.eq.s32.totalorder %s18, 1
      %p146 = scmp.ne.s32.totalorder %s141, %s143
      %p147 = scmp.eq.s32.totalorder %s18, 0
      %p148 = por %p146, %p147
      %p149 = scmp.ne.s32.totalorder %s141, %s143
      %p150 = scmp.eq.s32.totalorder %s23, 1
      %p151 = por %p149, %p150
      %p152 = scmp.ne.s32.totalorder %s143, %s144
      %p153 = scmp.eq.s32.totalorder %s23, 0
      %p154 = por %p152, %p153
      %p155 = scmp.ne.s32.totalorder %s143, %s144
      %p156 = scmp.eq.s32.totalorder %s24, 1
      %p157 = por %p155, %p156
      %p159 = scmp.ne.s32.totalorder %s144, %s158
      %p160 = scmp.eq.s32.totalorder %s24, 0
      %p161 = por %p159, %p160
      %s163 = sadd.s32 %s162, 1
      %p166 = scmp.eq.s32.totalorder %s18, 1
      %p167 = scmp.ne.s32.totalorder %s162, %s164
      %p168 = scmp.eq.s32.totalorder %s18, 0
      %p169 = por %p167, %p168
      %p170 = scmp.ne.s32.totalorder %s162, %s164
      %p171 = scmp.eq.s32.totalorder %s23, 1
      %p172 = por %p170, %p171
      %p173 = scmp.ne.s32.totalorder %s164, %s165
      %p174 = scmp.eq.s32.totalorder %s23, 0
      %p175 = por %p173, %p174
      %p176 = scmp.ne.s32.totalorder %s164, %s165
      %p177 = scmp.eq.s32.totalorder %s24, 1
      %p178 = por %p176, %p177
      %p180 = scmp.ne.s32.totalorder %s165, %s179
      %p181 = scmp.eq.s32.totalorder %s24, 0
      %p182 = por %p180, %p181
      %s183 = ssub.s32 %s18, %s25
      %p184 = scmp.eq.s32.totalorder %s183, 0
      %s186 = sadd.s32 %s185, 1
      %s187 = scalar_select %p184, %s185, %s186
      %p190 = pneg %p184
      %p191 = scmp.eq.s32.totalorder %s18, 1
      %p192 = por %p190, %p191
      %p193 = scmp.ne.s32.totalorder %s185, %s188
      %p194 = scmp.eq.s32.totalorder %s18, 0
      %p195 = por %p193, %p194
      %p196 = scmp.ne.s32.totalorder %s185, %s188
      %p197 = scmp.eq.s32.totalorder %s23, 1
      %p198 = por %p196, %p197
      %p199 = scmp.ne.s32.totalorder %s188, %s189
      %p200 = scmp.eq.s32.totalorder %s23, 0
      %p201 = por %p199, %p200
      %p202 = scmp.ne.s32.totalorder %s188, %s189
      %p203 = scmp.eq.s32.totalorder %s24, 1
      %p204 = por %p202, %p203
      %p206 = scmp.ne.s32.totalorder %s189, %s205
      %p207 = scmp.eq.s32.totalorder %s24, 0
      %p208 = por %p206, %p207
      %p209 = scmp.le.s32.totalorder 1, %s18
      %p210 = scmp.lt.s32.totalorder %s18, 3
      %p211 = pnand %p209, %p210
      %p212 = pneg %p211
      // Predicated region
      $region9: #{mamba_forward.1} parent=5 // pred_check
        _
      $region10: #{mamba_forward.1} parent=5 // pred_check_branch
        %214 = sbr.rel (%p211) target = $region12
      $region11: #{mamba_forward.1} parent=5 // pred_region
        %s215 = ssub.s32 %s18, 1
        // Predicated region
        $region13: #{mamba_forward.1} parent=11 // pred_check
          %p216 = pneg %p91
        $region14: #{mamba_forward.1} parent=11 // pred_check_branch
          %218 = sbr.rel (%p216) target = $region16
        $region15: #{mamba_forward.1} parent=11 // pred_region
          %s220 = ssub.s32 6144, 6144
          %221 = vsyncadd [#allocation3], %s220
          %s222 = sshll.u32 [#allocation2], 4
          %s223 = int_to_ptr.vmem [resolvable:$true] %s222
          %228 = dma.hbm_to_vmem [thread:$0]  %s2, 6144, %s223, [#allocation3], 256, 256, 16
        $region16: #{mamba_forward.1} parent=11 // pred_fallthru
          _
        // Predicated region
        $region17: #{mamba_forward.1} parent=11 // pred_check
          %p229 = pneg %p112
        $region18: #{mamba_forward.1} parent=11 // pred_check_branch
          %231 = sbr.rel (%p229) target = $region20
        $region19: #{mamba_forward.1} parent=11 // pred_region
          _
        $region20: #{mamba_forward.1} parent=11 // pred_fallthru
          _
        // Predicated region
        $region21: #{mamba_forward.1} parent=11 // pred_check
          %p232 = pneg %p133
        $region22: #{mamba_forward.1} parent=11 // pred_check_branch
          %234 = sbr.rel (%p232) target = $region24
        $region23: #{mamba_forward.1} parent=11 // pred_region
          %s236 = ssub.s32 9216, 9216
          %237 = vsyncadd [#allocation6], %s236
          %s238 = sshll.u32 [#allocation5], 4
          %s239 = int_to_ptr.vmem [resolvable:$true] %s238
          %244 = dma.hbm_to_vmem [thread:$0]  %s4, 9216, %s239, [#allocation6], 192, 192, 12
        $region24: #{mamba_forward.1} parent=11 // pred_fallthru
          _
        // Predicated region
        $region25: #{mamba_forward.1} parent=11 // pred_check
          %p245 = pneg %p154
        $region26: #{mamba_forward.1} parent=11 // pred_check_branch
          %247 = sbr.rel (%p245) target = $region28
        $region27: #{mamba_forward.1} parent=11 // pred_region
          _
        $region28: #{mamba_forward.1} parent=11 // pred_fallthru
          _
        // Predicated region
        $region29: #{mamba_forward.1} parent=11 // pred_check
          %p248 = pneg %p175
        $region30: #{mamba_forward.1} parent=11 // pred_check_branch
          %250 = sbr.rel (%p248) target = $region32
        $region31: #{mamba_forward.1} parent=11 // pred_region
          _
        $region32: #{mamba_forward.1} parent=11 // pred_fallthru
          _
      $region12: #{mamba_forward.1} parent=5 // pred_fallthru
        _
      %p251 = scmp.lt.s32.totalorder %s18, 2
      // Predicated region
      $region33: #{mamba_forward.1} parent=5 // pred_check
        %p252 = pneg %p251
      $region34: #{mamba_forward.1} parent=5 // pred_check_branch
        %254 = sbr.rel (%p252) target = $region36
      $region35: #{mamba_forward.1} parent=5 // pred_region
        // Predicated region
        $region37: #{mamba_forward.1} parent=35 // pred_check
          %p255 = pneg %p38
        $region38: #{mamba_forward.1} parent=35 // pred_check_branch
          %257 = sbr.rel (%p255) target = $region40
        $region39: #{mamba_forward.1} parent=35 // pred_region
          %p258 = scmp.lt.s32.totalorder %s18, 1
          %s259 = scalar_select %p258, %s18, 1
          %s260 = smul.addr %s259, 8
          %s261 = scalar_lea.vmem %s0, %s260
        $region40: #{mamba_forward.1} parent=35 // pred_fallthru
          _
        // Predicated region
        $region41: #{mamba_forward.1} parent=35 // pred_check
          %p262 = pneg %p64
        $region42: #{mamba_forward.1} parent=35 // pred_check_branch
          %264 = sbr.rel (%p262) target = $region44
        $region43: #{mamba_forward.1} parent=35 // pred_region
          %p265 = scmp.lt.s32.totalorder %s18, 1
          %s266 = scalar_select %p265, %s18, 1
          %s267 = smul.addr %s266, 8
          %s268 = scalar_lea.vmem %s1, %s267
        $region44: #{mamba_forward.1} parent=35 // pred_fallthru
          _
      $region36: #{mamba_forward.1} parent=5 // pred_fallthru
        _
      %p269 = scmp.le.s32.totalorder 1, %s18
      %p270 = scmp.lt.s32.totalorder %s18, 3
      %p271 = pnand %p269, %p270
      %p272 = pneg %p271
      // Predicated region
      $region45: #{mamba_forward.1} parent=5 // pred_check
        _
      $region46: #{mamba_forward.1} parent=5 // pred_check_branch
        %274 = sbr.rel (%p271) target = $region48
      $region47: #{mamba_forward.1} parent=5 // pred_region
        %s275 = ssub.s32 %s18, 1
        // Predicated region
        $region49: #{mamba_forward.1} parent=47 // pred_check
          %p276 = pneg %p91
        $region50: #{mamba_forward.1} parent=47 // pred_check_branch
          %278 = sbr.rel (%p276) target = $region52
        $region51: #{mamba_forward.1} parent=47 // pred_region
          %279 = dma.done [#allocation3], 6144
        $region52: #{mamba_forward.1} parent=47 // pred_fallthru
          _
        // Predicated region
        $region53: #{mamba_forward.1} parent=47 // pred_check
          %p280 = pneg %p133
        $region54: #{mamba_forward.1} parent=47 // pred_check_branch
          %282 = sbr.rel (%p280) target = $region56
        $region55: #{mamba_forward.1} parent=47 // pred_region
          %283 = dma.done [#allocation6], 9216
        $region56: #{mamba_forward.1} parent=47 // pred_fallthru
          _
        %p284 = scmp.lt.s32.totalorder %s23, 1
        %s285 = scalar_select %p284, %s23, 1
        %s286 = smul.addr %s285, 8
        %s287 = scalar_lea.vmem %s0, %s286
        %p288 = pneg %p44
        %p289 = pneg %p41
        %p290 = scmp.lt.s32.totalorder %s23, 1
        %s291 = scalar_select %p290, %s23, 1
        %s292 = smul.addr %s291, 8
        %s293 = scalar_lea.vmem %s1, %s292
        %p294 = pneg %p70
        %p295 = pneg %p67
        %p296 = pneg %p91
        %p297 = pneg %p88
        %p298 = pneg %p112
        %p299 = pneg %p109
        %p300 = pneg %p133
        %p301 = pneg %p130
        %p302 = pneg %p154
        %p303 = pneg %p151
        %p304 = pneg %p175
        %p305 = pneg %p172
        %p306 = pneg %p201
        %p307 = pneg %p198
        %s308 = sand.u32 %s188, 1
        %s309 = scalar_lea.sflag [#allocation4], %s308
        %s310 = sand.u32 %s188, 1
        %s311 = smul.addr %s310, 8
        %s312 = scalar_lea.vmem [#allocation7], %s311
        %p313 = scmp.lt.s32.totalorder %s23, 1
        %s314 = scalar_select %p313, %s23, 1
        %s315 = smul.addr %s314, 8
        %s316 = scalar_lea.vmem %s0, %s315
        %p317 = scmp.lt.s32.totalorder %s23, 1
        %s318 = scalar_select %p317, %s23, 1
        %s319 = smul.addr %s318, 8
        %s320 = scalar_lea.vmem %s1, %s319
        %v322 = vld [vmem:[%s316] sm:$0xff]
        %v323 = vld [vmem:[%s320] sm:$0xff]
        %v324 = vld [vmem:[%s6] sm:$0xff]
        %v325 = vld [vmem:[%s6 + $0x8] sm:$0xff]
        %v326 = vmul.f32 %v322, %v322
        %vm327 = vcmask 523264
        %v328 = vsel %vm327, %v326, 0.0
        %329 = vadd.xlane.f32.xlu0 %v328
        %v330 = vpop.xlane.xlu0 %329
        %v331 = vrcp.pop 64.0
        %v332 = vmul.f32 %v330, %v331
        %v333 = vadd.f32 %v332, 1e-05
        %v334 = vrsqrt.pop %v333
        %v335 = vmul.f32 %v322, %v334
        %v336 = vpack.c.bf16 %v335, %v335
        %v337 = vld [vmem:[#allocation2] sm:$0xff]
        %v338 = vld [vmem:[#allocation2 + $0x8] sm:$0xff]
        %v339 = vld [vmem:[#allocation2 + $0x10] sm:$0xff]
        %v340 = vld [vmem:[#allocation2 + $0x18] sm:$0xff]
        %v341 = vld [vmem:[#allocation2 + $0x20] sm:$0xff]
        %v342 = vld [vmem:[#allocation2 + $0x28] sm:$0xff]
        %v343 = vld [vmem:[#allocation2 + $0x30] sm:$0xff]
        %v344 = vld [vmem:[#allocation2 + $0x38] sm:$0xff]
        %v345 = vld [vmem:[#allocation2 + $0x40] sm:$0xff]
        %v346 = vld [vmem:[#allocation2 + $0x48] sm:$0xff]
        %v347 = vld [vmem:[#allocation2 + $0x50] sm:$0xff]
        %v348 = vld [vmem:[#allocation2 + $0x58] sm:$0xff]
        %v349 = vld [vmem:[#allocation2 + $0x60] sm:$0xff]
        %v350 = vld [vmem:[#allocation2 + $0x68] sm:$0xff]
        %v351 = vld [vmem:[#allocation2 + $0x70] sm:$0xff]
        %v352 = vld [vmem:[#allocation2 + $0x78] sm:$0xff]
        %v355 = vlaneseq
        %v356 = vshrl.u32 %v355, 7
        %v357 = vsub.s32 0, %v356
        %v358 = vrot.slane %v324, %v357
        %v359 = vlaneseq
        %v360 = vshrl.u32 %v359, 7
        %v361 = vsub.s32 4, %v360
        %v362 = vrot.slane %v324, %v361
        %v363 = vlaneseq
        %v364 = vshrl.u32 %v363, 7
        %v365 = vsub.s32 0, %v364
        %v366 = vrot.slane %v325, %v365
        %v367 = vlaneseq
        %v368 = vshrl.u32 %v367, 7
        %v369 = vsub.s32 4, %v368
        %v370 = vrot.slane %v325, %v369
        %v375 = vlaneseq
        %v376 = vshrl.u32 %v375, 7
        %v377 = vsub.s32 0, %v376
        %v378 = vrot.slane %v358, %v377
        %v379 = vlaneseq
        %v380 = vshrl.u32 %v379, 7
        %v381 = vsub.s32 0, %v380
        %v382 = vrot.slane %v362, %v381
        %v383 = vlaneseq
        %v384 = vshrl.u32 %v383, 7
        %v385 = vsub.s32 0, %v384
        %v386 = vrot.slane %v366, %v385
        %v387 = vlaneseq
        %v388 = vshrl.u32 %v387, 7
        %v389 = vsub.s32 0, %v388
        %v390 = vrot.slane %v370, %v389
        %v407 = vunpack.c.l.b16 %v337
        %v408 = vunpack.c.h.b16 %v337
        %v409 = vunpack.c.l.b16 %v338
        %v410 = vunpack.c.h.b16 %v338
        %v411 = vunpack.c.l.b16 %v339
        %v412 = vunpack.c.h.b16 %v339
        %v413 = vunpack.c.l.b16 %v340
        %v414 = vunpack.c.h.b16 %v340
        %v415 = vunpack.c.l.b16 %v341
        %v416 = vunpack.c.h.b16 %v341
        %v417 = vunpack.c.l.b16 %v342
        %v418 = vunpack.c.h.b16 %v342
        %v419 = vunpack.c.l.b16 %v343
        %v420 = vunpack.c.h.b16 %v343
        %v421 = vunpack.c.l.b16 %v344
        %v422 = vunpack.c.h.b16 %v344
        %v423 = vunpack.c.l.b16 %v345
        %v424 = vunpack.c.h.b16 %v345
        %v425 = vunpack.c.l.b16 %v346
        %v426 = vunpack.c.h.b16 %v346
        %v427 = vunpack.c.l.b16 %v347
        %v428 = vunpack.c.h.b16 %v347
        %v429 = vunpack.c.l.b16 %v348
        %v430 = vunpack.c.h.b16 %v348
        %v431 = vunpack.c.l.b16 %v349
        %v432 = vunpack.c.h.b16 %v349
        %v433 = vunpack.c.l.b16 %v350
        %v434 = vunpack.c.h.b16 %v350
        %v435 = vunpack.c.l.b16 %v351
        %v436 = vunpack.c.h.b16 %v351
        %v437 = vunpack.c.l.b16 %v352
        %v438 = vunpack.c.h.b16 %v352
        %v439 = vpack.c.b16 %v411, %v407
        %v440 = vpack.c.b16 %v412, %v408
        %v441 = vpack.c.b16 %v413, %v409
        %v442 = vpack.c.b16 %v414, %v410
        %v443 = vpack.c.b16 %v419, %v415
        %v444 = vpack.c.b16 %v420, %v416
        %v445 = vpack.c.b16 %v421, %v417
        %v446 = vpack.c.b16 %v422, %v418
        %v447 = vpack.c.b16 %v427, %v423
        %v448 = vpack.c.b16 %v428, %v424
        %v449 = vpack.c.b16 %v429, %v425
        %v450 = vpack.c.b16 %v430, %v426
        %v451 = vpack.c.b16 %v435, %v431
        %v452 = vpack.c.b16 %v436, %v432
        %v453 = vpack.c.b16 %v437, %v433
        %v454 = vpack.c.b16 %v438, %v434
        %v472 = vsel %vm327, %v336, 0
        %474 = vmatprep.subr.bf16.mxu0 0
        %475 = vmatpush1.bf16.msra.mxu0 0
        %476 = vmatprep.subr.bf16.mxu0 0
        %477 = vmatpush1.bf16.msra.mxu0 0
        %478 = vmatprep.subr.bf16.mxu0 0
        %479 = vmatpush1.bf16.msra.mxu0 0
        %480 = vmatprep.subr.bf16.mxu0 0
        %481 = vmatpush1.bf16.msra.mxu0 0
        %482 = vmatprep.subr.bf16.mxu0 %v452
        %483 = vmatpush1.bf16.msra.mxu0 %v451
        %484 = vmatprep.subr.bf16.mxu0 %v448
        %485 = vmatpush1.bf16.msra.mxu0 %v447
        %486 = vmatprep.subr.bf16.mxu0 %v444
        %487 = vmatpush1.bf16.msra.mxu0 %v443
        %488 = vmatprep.subr.bf16.mxu0 %v440
        %489 = vmatpush1.bf16.msra.mxu0 %v439
        %490 = vmatprep.subr.bf16.mxu0 0
        %491 = vmatpush2.bf16.msra.mxu0 0
        %492 = vmatprep.subr.bf16.mxu0 0
        %493 = vmatpush2.bf16.msra.mxu0 0
        %494 = vmatprep.subr.bf16.mxu0 0
        %495 = vmatpush2.bf16.msra.mxu0 0
        %496 = vmatprep.subr.bf16.mxu0 0
        %497 = vmatpush2.bf16.msra.mxu0 0
        %498 = vmatprep.subr.bf16.mxu0 0
        %499 = vmatpush2.bf16.msra.mxu0 0
        %500 = vmatprep.subr.bf16.mxu0 0
        %501 = vmatpush2.bf16.msra.mxu0 0
        %502 = vmatprep.subr.bf16.mxu0 0
        %503 = vmatpush2.bf16.msra.mxu0 0
        %504 = vmatprep.subr.bf16.mxu0 0
        %505 = vmatpush2.bf16.msra.mxu0 0
        %506 = vmatprep.mubr.bf16.mxu0 0
        %507 = vmatmul.mubr.bf16.gmra.mxu0 %v472
        %v508 = vpop.f32.mrf.mxu0
        %v509 = vadd.f32 %v378, %v508
        %v510 = vpop.f32.mrf.mxu0
        %v511 = vadd.f32 %v382, %v510
        %v512 = vpop.f32.mrf.mxu0
        %v513 = vpop.f32.mrf.mxu0
        %514 = vdwg.mxu0
        %515 = vmatprep.subr.bf16.mxu0 0
        %516 = vmatpush1.bf16.msra.mxu0 0
        %517 = vmatprep.subr.bf16.mxu0 0
        %518 = vmatpush1.bf16.msra.mxu0 0
        %519 = vmatprep.subr.bf16.mxu0 0
        %520 = vmatpush1.bf16.msra.mxu0 0
        %521 = vmatprep.subr.bf16.mxu0 0
        %522 = vmatpush1.bf16.msra.mxu0 0
        %523 = vmatprep.subr.bf16.mxu0 %v454
        %524 = vmatpush1.bf16.msra.mxu0 %v453
        %525 = vmatprep.subr.bf16.mxu0 %v450
        %526 = vmatpush1.bf16.msra.mxu0 %v449
        %527 = vmatprep.subr.bf16.mxu0 %v446
        %528 = vmatpush1.bf16.msra.mxu0 %v445
        %529 = vmatprep.subr.bf16.mxu0 %v442
        %530 = vmatpush1.bf16.msra.mxu0 %v441
        %531 = vmatprep.subr.bf16.mxu0 0
        %532 = vmatpush2.bf16.msra.mxu0 0
        %533 = vmatprep.subr.bf16.mxu0 0
        %534 = vmatpush2.bf16.msra.mxu0 0
        %535 = vmatprep.subr.bf16.mxu0 0
        %536 = vmatpush2.bf16.msra.mxu0 0
        %537 = vmatprep.subr.bf16.mxu0 0
        %538 = vmatpush2.bf16.msra.mxu0 0
        %539 = vmatprep.subr.bf16.mxu0 0
        %540 = vmatpush2.bf16.msra.mxu0 0
        %541 = vmatprep.subr.bf16.mxu0 0
        %542 = vmatpush2.bf16.msra.mxu0 0
        %543 = vmatprep.subr.bf16.mxu0 0
        %544 = vmatpush2.bf16.msra.mxu0 0
        %545 = vmatprep.subr.bf16.mxu0 0
        %546 = vmatpush2.bf16.msra.mxu0 0
        %547 = vmatprep.mubr.bf16.mxu0 0
        %548 = vmatmul.mubr.bf16.gmra.mxu0 %v472
        %v549 = vpop.f32.mrf.mxu0
        %v550 = vadd.f32 %v386, %v549
        %v551 = vpop.f32.mrf.mxu0
        %v552 = vadd.f32 %v390, %v551
        %v553 = vpop.f32.mrf.mxu0
        %v554 = vpop.f32.mrf.mxu0
        %555 = vdwg.mxu0
        %557 = vset.pattern.permute.xlu0 0
        %558 = vperm.xlu0 %557, %v323
        %v559 = vpop.permute.xlu0 %558
        %v561 = vmul.f32 %v559, %v511
        %562 = vset.pattern.permute.xlu0 1
        %563 = vperm.xlu0 %562, %v323
        %v564 = vpop.permute.xlu0 %563
        %v566 = vmul.f32 %v564, %v509
        %v567 = vadd.f32 %v561, %v566
        %568 = vset.pattern.permute.xlu0 2
        %569 = vperm.xlu0 %568, %v323
        %v570 = vpop.permute.xlu0 %569
        %v572 = vmul.f32 %v570, %v550
        %v573 = vadd.f32 %v567, %v572
        %574 = vset.pattern.permute.xlu0 3
        %575 = vperm.xlu0 %574, %v323
        %v576 = vpop.permute.xlu0 %575
        %v578 = vadd.f32 %v573, %v576
        %v579 = vxor.u32 %v578, 2147483648
        %v580 = vmul.f32 %v579, 1.442695
        %v581 = vpow.pop %v580
        %v582 = vadd.f32 %v581, 1.0
        %v583 = vrcp.pop %v582
        %v584 = vmul.f32 1.0, %v583
        %v585 = vmul.f32 %v578, %v584
        %v586 = vpack.c.bf16 %v585, %v585
        %v587 = vld [vmem:[%s3] sm:$0xf]
        %v588 = vld [vmem:[%s3 + $0x4] sm:$0xf]
        %v589 = vld [vmem:[%s3 + $0x8] sm:$0xf]
        %v590 = vld [vmem:[%s3 + $0xc] sm:$0xf]
        %v591 = vld [vmem:[%s3 + $0x10] sm:$0xf]
        %v592 = vld [vmem:[%s3 + $0x14] sm:$0xf]
        %v593 = vld [vmem:[%s3 + $0x18] sm:$0xf]
        %v594 = vld [vmem:[%s3 + $0x1c] sm:$0xf]
        %v595 = vld [vmem:[%s3 + $0x20] sm:$0xf]
        %v596 = vld [vmem:[%s3 + $0x24] sm:$0xf]
        %v597 = vld [vmem:[%s3 + $0x28] sm:$0xf]
        %v598 = vld [vmem:[%s3 + $0x2c] sm:$0xf]
        %v599 = vld [vmem:[%s3 + $0x30] sm:$0xf]
        %v600 = vld [vmem:[%s3 + $0x34] sm:$0xf]
        %v601 = vld [vmem:[%s3 + $0x38] sm:$0xf]
        %v602 = vld [vmem:[%s3 + $0x3c] sm:$0xf]
        %v603 = vlaneseq
        %v604 = vshrl.u32 %v603, 7
        %v605 = vsub.s32 1, %v604
        %v606 = vrot.slane %v324, %v605
        %v623 = vunpack.c.l.b16 %v587
        %v624 = vunpack.c.l.b16 %v588
        %v625 = vunpack.c.l.b16 %v589
        %v626 = vunpack.c.l.b16 %v590
        %v627 = vunpack.c.l.b16 %v591
        %v628 = vunpack.c.l.b16 %v592
        %v629 = vunpack.c.l.b16 %v593
        %v630 = vunpack.c.l.b16 %v594
        %v631 = vunpack.c.l.b16 %v595
        %v632 = vunpack.c.l.b16 %v596
        %v633 = vunpack.c.l.b16 %v597
        %v634 = vunpack.c.l.b16 %v598
        %v635 = vunpack.c.l.b16 %v599
        %v636 = vunpack.c.l.b16 %v600
        %v637 = vunpack.c.l.b16 %v601
        %v638 = vunpack.c.l.b16 %v602
        %v639 = vpack.c.b16 %v624, %v623
        %v640 = vpack.c.b16 %v626, %v625
        %v641 = vpack.c.b16 %v628, %v627
        %v642 = vpack.c.b16 %v630, %v629
        %v643 = vpack.c.b16 %v632, %v631
        %v644 = vpack.c.b16 %v634, %v633
        %v645 = vpack.c.b16 %v636, %v635
        %v646 = vpack.c.b16 %v638, %v637
        %655 = vmatprep.subr.bf16.mxu0 0
        %656 = vmatpush1.bf16.msra.mxu0 %v646
        %657 = vmatprep.subr.bf16.mxu0 0
        %658 = vmatpush1.bf16.msra.mxu0 %v645
        %659 = vmatprep.subr.bf16.mxu0 0
        %660 = vmatpush1.bf16.msra.mxu0 %v644
        %661 = vmatprep.subr.bf16.mxu0 0
        %662 = vmatpush1.bf16.msra.mxu0 %v643
        %663 = vmatprep.subr.bf16.mxu0 0
        %664 = vmatpush1.bf16.msra.mxu0 %v642
        %665 = vmatprep.subr.bf16.mxu0 0
        %666 = vmatpush1.bf16.msra.mxu0 %v641
        %667 = vmatprep.subr.bf16.mxu0 0
        %668 = vmatpush1.bf16.msra.mxu0 %v640
        %669 = vmatprep.subr.bf16.mxu0 0
        %670 = vmatpush1.bf16.msra.mxu0 %v639
        %671 = vmatprep.subr.bf16.mxu0 0
        %672 = vmatpush2.bf16.msra.mxu0 0
        %673 = vmatprep.subr.bf16.mxu0 0
        %674 = vmatpush2.bf16.msra.mxu0 0
        %675 = vmatprep.subr.bf16.mxu0 0
        %676 = vmatpush2.bf16.msra.mxu0 0
        %677 = vmatprep.subr.bf16.mxu0 0
        %678 = vmatpush2.bf16.msra.mxu0 0
        %679 = vmatprep.subr.bf16.mxu0 0
        %680 = vmatpush2.bf16.msra.mxu0 0
        %681 = vmatprep.subr.bf16.mxu0 0
        %682 = vmatpush2.bf16.msra.mxu0 0
        %683 = vmatprep.subr.bf16.mxu0 0
        %684 = vmatpush2.bf16.msra.mxu0 0
        %685 = vmatprep.subr.bf16.mxu0 0
        %686 = vmatpush2.bf16.msra.mxu0 0
        %687 = vmatprep.mubr.bf16.mxu0 0
        %688 = vmatmul.mubr.bf16.gmra.mxu0 %v586
        %v689 = vpop.f32.mrf.mxu0
        %v690 = vadd.f32 %v606, %v689
        %v691 = vpop.f32.mrf.mxu0
        %v692 = vpop.f32.mrf.mxu0
        %v693 = vpop.f32.mrf.mxu0
        %694 = vdwg.mxu0
        %v695 = vpack.c.bf16 %v690, %v690
        %v696 = vld [vmem:[#allocation5] sm:$0xff]
        %v697 = vld [vmem:[#allocation5 + $0x8] sm:$0xf]
        %v698 = vld [vmem:[#allocation5 + $0xc] sm:$0xff]
        %v699 = vld [vmem:[#allocation5 + $0x14] sm:$0xf]
        %v700 = vld [vmem:[#allocation5 + $0x18] sm:$0xff]
        %v701 = vld [vmem:[#allocation5 + $0x20] sm:$0xf]
        %v702 = vld [vmem:[#allocation5 + $0x24] sm:$0xff]
        %v703 = vld [vmem:[#allocation5 + $0x2c] sm:$0xf]
        %v704 = vld [vmem:[#allocation5 + $0x30] sm:$0xff]
        %v705 = vld [vmem:[#allocation5 + $0x38] sm:$0xf]
        %v706 = vld [vmem:[#allocation5 + $0x3c] sm:$0xff]
        %v707 = vld [vmem:[#allocation5 + $0x44] sm:$0xf]
        %v708 = vld [vmem:[#allocation5 + $0x48] sm:$0xff]
        %v709 = vld [vmem:[#allocation5 + $0x50] sm:$0xf]
        %v710 = vld [vmem:[#allocation5 + $0x54] sm:$0xff]
        %v711 = vld [vmem:[#allocation5 + $0x5c] sm:$0xf]
        %v712 = vld [vmem:[#allocation5 + $0x60] sm:$0xff]
        %v713 = vld [vmem:[#allocation5 + $0x68] sm:$0xf]
        %v714 = vld [vmem:[#allocation5 + $0x6c] sm:$0xff]
        %v715 = vld [vmem:[#allocation5 + $0x74] sm:$0xf]
        %v716 = vld [vmem:[#allocation5 + $0x78] sm:$0xff]
        %v717 = vld [vmem:[#allocation5 + $0x80] sm:$0xf]
        %v718 = vld [vmem:[#allocation5 + $0x84] sm:$0xff]
        %v719 = vld [vmem:[#allocation5 + $0x8c] sm:$0xf]
        %v720 = vld [vmem:[#allocation5 + $0x90] sm:$0xff]
        %v721 = vld [vmem:[#allocation5 + $0x98] sm:$0xf]
        %v722 = vld [vmem:[#allocation5 + $0x9c] sm:$0xff]
        %v723 = vld [vmem:[#allocation5 + $0xa4] sm:$0xf]
        %v724 = vld [vmem:[#allocation5 + $0xa8] sm:$0xff]
        %v725 = vld [vmem:[#allocation5 + $0xb0] sm:$0xf]
        %v726 = vld [vmem:[#allocation5 + $0xb4] sm:$0xff]
        %v727 = vld [vmem:[#allocation5 + $0xbc] sm:$0xf]
        %v728 = vlaneseq
        %v729 = vshrl.u32 %v728, 7
        %v730 = vsub.s32 2, %v729
        %v731 = vrot.slane %v324, %v730
        %v732 = vlaneseq
        %v733 = vshrl.u32 %v732, 7
        %v734 = vsub.s32 6, %v733
        %v735 = vrot.slane %v324, %v734
        %v736 = vlaneseq
        %v737 = vshrl.u32 %v736, 7
        %v738 = vsub.s32 2, %v737
        %v739 = vrot.slane %v325, %v738
        %v743 = vlaneseq
        %v744 = vshrl.u32 %v743, 7
        %v745 = vsub.s32 2, %v744
        %v746 = vrot.slane %v731, %v745
        %v747 = vlaneseq
        %v748 = vshrl.u32 %v747, 7
        %v749 = vsub.s32 2, %v748
        %v750 = vrot.slane %v735, %v749
        %v751 = vlaneseq
        %v752 = vshrl.u32 %v751, 7
        %v753 = vsub.s32 2, %v752
        %v754 = vrot.slane %v739, %v753
        %v787 = vunpack.c.l.b16 %v696
        %v788 = vunpack.c.h.b16 %v696
        %v789 = vunpack.c.l.b16 %v697
        %v790 = vunpack.c.l.b16 %v698
        %v791 = vunpack.c.h.b16 %v698
        %v792 = vunpack.c.l.b16 %v699
        %v793 = vunpack.c.l.b16 %v700
        %v794 = vunpack.c.h.b16 %v700
        %v795 = vunpack.c.l.b16 %v701
        %v796 = vunpack.c.l.b16 %v702
        %v797 = vunpack.c.h.b16 %v702
        %v798 = vunpack.c.l.b16 %v703
        %v799 = vunpack.c.l.b16 %v704
        %v800 = vunpack.c.h.b16 %v704
        %v801 = vunpack.c.l.b16 %v705
        %v802 = vunpack.c.l.b16 %v706
        %v803 = vunpack.c.h.b16 %v706
        %v804 = vunpack.c.l.b16 %v707
        %v805 = vunpack.c.l.b16 %v708
        %v806 = vunpack.c.h.b16 %v708
        %v807 = vunpack.c.l.b16 %v709
        %v808 = vunpack.c.l.b16 %v710
        %v809 = vunpack.c.h.b16 %v710
        %v810 = vunpack.c.l.b16 %v711
        %v811 = vunpack.c.l.b16 %v712
        %v812 = vunpack.c.h.b16 %v712
        %v813 = vunpack.c.l.b16 %v713
        %v814 = vunpack.c.l.b16 %v714
        %v815 = vunpack.c.h.b16 %v714
        %v816 = vunpack.c.l.b16 %v715
        %v817 = vunpack.c.l.b16 %v716
        %v818 = vunpack.c.h.b16 %v716
        %v819 = vunpack.c.l.b16 %v717
        %v820 = vunpack.c.l.b16 %v718
        %v821 = vunpack.c.h.b16 %v718
        %v822 = vunpack.c.l.b16 %v719
        %v823 = vunpack.c.l.b16 %v720
        %v824 = vunpack.c.h.b16 %v720
        %v825 = vunpack.c.l.b16 %v721
        %v826 = vunpack.c.l.b16 %v722
        %v827 = vunpack.c.h.b16 %v722
        %v828 = vunpack.c.l.b16 %v723
        %v829 = vunpack.c.l.b16 %v724
        %v830 = vunpack.c.h.b16 %v724
        %v831 = vunpack.c.l.b16 %v725
        %v832 = vunpack.c.l.b16 %v726
        %v833 = vunpack.c.h.b16 %v726
        %v834 = vunpack.c.l.b16 %v727
        %v835 = vpack.c.b16 %v790, %v787
        %v836 = vpack.c.b16 %v791, %v788
        %v837 = vpack.c.b16 %v792, %v789
        %v838 = vpack.c.b16 %v796, %v793
        %v839 = vpack.c.b16 %v797, %v794
        %v840 = vpack.c.b16 %v798, %v795
        %v841 = vpack.c.b16 %v802, %v799
        %v842 = vpack.c.b16 %v803, %v800
        %v843 = vpack.c.b16 %v804, %v801
        %v844 = vpack.c.b16 %v808, %v805
        %v845 = vpack.c.b16 %v809, %v806
        %v846 = vpack.c.b16 %v810, %v807
        %v847 = vpack.c.b16 %v814, %v811
        %v848 = vpack.c.b16 %v815, %v812
        %v849 = vpack.c.b16 %v816, %v813
        %v850 = vpack.c.b16 %v820, %v817
        %v851 = vpack.c.b16 %v821, %v818
        %v852 = vpack.c.b16 %v822, %v819
        %v853 = vpack.c.b16 %v826, %v823
        %v854 = vpack.c.b16 %v827, %v824
        %v855 = vpack.c.b16 %v828, %v825
        %v856 = vpack.c.b16 %v832, %v829
        %v857 = vpack.c.b16 %v833, %v830
        %v858 = vpack.c.b16 %v834, %v831
        %883 = vmatprep.subr.bf16.mxu0 %v857
        %884 = vmatpush1.bf16.msra.mxu0 %v856
        %885 = vmatprep.subr.bf16.mxu0 %v854
        %886 = vmatpush1.bf16.msra.mxu0 %v853
        %887 = vmatprep.subr.bf16.mxu0 %v851
        %888 = vmatpush1.bf16.msra.mxu0 %v850
        %889 = vmatprep.subr.bf16.mxu0 %v848
        %890 = vmatpush1.bf16.msra.mxu0 %v847
        %891 = vmatprep.subr.bf16.mxu0 %v845
        %892 = vmatpush1.bf16.msra.mxu0 %v844
        %893 = vmatprep.subr.bf16.mxu0 %v842
        %894 = vmatpush1.bf16.msra.mxu0 %v841
        %895 = vmatprep.subr.bf16.mxu0 %v839
        %896 = vmatpush1.bf16.msra.mxu0 %v838
        %897 = vmatprep.subr.bf16.mxu0 %v836
        %898 = vmatpush1.bf16.msra.mxu0 %v835
        %899 = vmatprep.subr.bf16.mxu0 0
        %900 = vmatpush2.bf16.msra.mxu0 0
        %901 = vmatprep.subr.bf16.mxu0 0
        %902 = vmatpush2.bf16.msra.mxu0 0
        %903 = vmatprep.subr.bf16.mxu0 0
        %904 = vmatpush2.bf16.msra.mxu0 0
        %905 = vmatprep.subr.bf16.mxu0 0
        %906 = vmatpush2.bf16.msra.mxu0 0
        %907 = vmatprep.subr.bf16.mxu0 0
        %908 = vmatpush2.bf16.msra.mxu0 0
        %909 = vmatprep.subr.bf16.mxu0 0
        %910 = vmatpush2.bf16.msra.mxu0 0
        %911 = vmatprep.subr.bf16.mxu0 0
        %912 = vmatpush2.bf16.msra.mxu0 0
        %913 = vmatprep.subr.bf16.mxu0 0
        %914 = vmatpush2.bf16.msra.mxu0 0
        %915 = vmatprep.mubr.bf16.mxu0 0
        %916 = vmatmul.mubr.bf16.gmra.mxu0 %v695
        %v917 = vpop.f32.mrf.mxu0
        %v918 = vadd.f32 %v746, %v917
        %v919 = vpop.f32.mrf.mxu0
        %v920 = vadd.f32 %v750, %v919
        %v921 = vpop.f32.mrf.mxu0
        %v922 = vpop.f32.mrf.mxu0
        %923 = vdwg.mxu0
        %924 = vmatprep.subr.bf16.mxu0 0
        %925 = vmatpush1.bf16.msra.mxu0 %v858
        %926 = vmatprep.subr.bf16.mxu0 0
        %927 = vmatpush1.bf16.msra.mxu0 %v855
        %928 = vmatprep.subr.bf16.mxu0 0
        %929 = vmatpush1.bf16.msra.mxu0 %v852
        %930 = vmatprep.subr.bf16.mxu0 0
        %931 = vmatpush1.bf16.msra.mxu0 %v849
        %932 = vmatprep.subr.bf16.mxu0 0
        %933 = vmatpush1.bf16.msra.mxu0 %v846
        %934 = vmatprep.subr.bf16.mxu0 0
        %935 = vmatpush1.bf16.msra.mxu0 %v843
        %936 = vmatprep.subr.bf16.mxu0 0
        %937 = vmatpush1.bf16.msra.mxu0 %v840
        %938 = vmatprep.subr.bf16.mxu0 0
        %939 = vmatpush1.bf16.msra.mxu0 %v837
        %940 = vmatprep.subr.bf16.mxu0 0
        %941 = vmatpush2.bf16.msra.mxu0 0
        %942 = vmatprep.subr.bf16.mxu0 0
        %943 = vmatpush2.bf16.msra.mxu0 0
        %944 = vmatprep.subr.bf16.mxu0 0
        %945 = vmatpush2.bf16.msra.mxu0 0
        %946 = vmatprep.subr.bf16.mxu0 0
        %947 = vmatpush2.bf16.msra.mxu0 0
        %948 = vmatprep.subr.bf16.mxu0 0
        %949 = vmatpush2.bf16.msra.mxu0 0
        %950 = vmatprep.subr.bf16.mxu0 0
        %951 = vmatpush2.bf16.msra.mxu0 0
        %952 = vmatprep.subr.bf16.mxu0 0
        %953 = vmatpush2.bf16.msra.mxu0 0
        %954 = vmatprep.subr.bf16.mxu0 0
        %955 = vmatpush2.bf16.msra.mxu0 0
        %956 = vmatprep.mubr.bf16.mxu0 0
        %957 = vmatmul.mubr.bf16.gmra.mxu0 %v695
        %v958 = vpop.f32.mrf.mxu0
        %v959 = vadd.f32 %v754, %v958
        %v960 = vpop.f32.mrf.mxu0
        %v961 = vpop.f32.mrf.mxu0
        %v962 = vpop.f32.mrf.mxu0
        %963 = vdwg.mxu0
        %v964 = vmax.f32 %v918, 0.0
        %v965 = vand.u32 2147483647, %v918
        %v966 = vsub.f32 0.0, %v965
        %v967 = vmul.f32 %v966, 1.442695
        %v968 = vpow.pop %v967
        %v969 = vadd.f32 %v968, 1.0
        %v970 = vlog2.pop %v969
        %v971 = vmul.f32 %v970, 0.6931472
        %v972 = vmul.f32 -0.5, %v968
        %v973 = vadd.f32 %v972, 1.0
        %v974 = vmul.f32 %v973, %v968
        %v975 = vand.u32 2147483647, %v968
        %vm976 = vcmp.lt.f32.partialorder %v975, 0.0004427343
        %v977 = vsel %vm976, %v974, %v971
        %v978 = vadd.f32 %v964, %v977
        %v979 = vmul.f32 %v920, %v959
        %980 = vadd.xlane.f32.xlu0 %v979
        %v981 = vpop.xlane.xlu0 %980
        %v982 = vmul.f32 %v690, %v978
        %v983 = vmul.f32 %v982, %v981
        %v984 = vxor.u32 %v983, 2147483648
        %v985 = vmul.f32 %v984, 1.442695
        %v986 = vpow.pop %v985
        %v987 = vadd.f32 %v986, 1.0
        %v988 = vrcp.pop %v987
        %v989 = vmul.f32 1.0, %v988
        %v990 = vmul.f32 %v983, %v989
        %v991 = vxor.u32 %v552, 2147483648
        %v992 = vmul.f32 %v991, 1.442695
        %v993 = vpow.pop %v992
        %v994 = vadd.f32 %v993, 1.0
        %v995 = vrcp.pop %v994
        %v996 = vmul.f32 1.0, %v995
        %v997 = vmul.f32 %v552, %v996
        %v998 = vmul.f32 %v990, %v997
        %v999 = vpack.c.bf16 %v998, %v998
        %v1000 = vld [vmem:[%s5] sm:$0xf]
        %v1001 = vld [vmem:[%s5 + $0x4] sm:$0xf]
        %v1002 = vld [vmem:[%s5 + $0x8] sm:$0xf]
        %v1003 = vld [vmem:[%s5 + $0xc] sm:$0xf]
        %v1004 = vld [vmem:[%s5 + $0x10] sm:$0xf]
        %v1005 = vld [vmem:[%s5 + $0x14] sm:$0xf]
        %v1006 = vld [vmem:[%s5 + $0x18] sm:$0xf]
        %v1007 = vld [vmem:[%s5 + $0x1c] sm:$0xf]
        %v1008 = vld [vmem:[%s5 + $0x20] sm:$0xf]
        %v1009 = vld [vmem:[%s5 + $0x24] sm:$0xf]
        %v1010 = vld [vmem:[%s5 + $0x28] sm:$0xf]
        %v1011 = vld [vmem:[%s5 + $0x2c] sm:$0xf]
        %v1012 = vld [vmem:[%s5 + $0x30] sm:$0xf]
        %v1013 = vld [vmem:[%s5 + $0x34] sm:$0xf]
        %v1014 = vld [vmem:[%s5 + $0x38] sm:$0xf]
        %v1015 = vld [vmem:[%s5 + $0x3c] sm:$0xf]
        %v1016 = vlaneseq
        %v1017 = vshrl.u32 %v1016, 7
        %v1018 = vsub.s32 3, %v1017
        %v1019 = vrot.slane %v324, %v1018
        %v1036 = vunpack.c.l.b16 %v1000
        %v1037 = vunpack.c.l.b16 %v1001
        %v1038 = vunpack.c.l.b16 %v1002
        %v1039 = vunpack.c.l.b16 %v1003
        %v1040 = vunpack.c.l.b16 %v1004
        %v1041 = vunpack.c.l.b16 %v1005
        %v1042 = vunpack.c.l.b16 %v1006
        %v1043 = vunpack.c.l.b16 %v1007
        %v1044 = vunpack.c.l.b16 %v1008
        %v1045 = vunpack.c.l.b16 %v1009
        %v1046 = vunpack.c.l.b16 %v1010
        %v1047 = vunpack.c.l.b16 %v1011
        %v1048 = vunpack.c.l.b16 %v1012
        %v1049 = vunpack.c.l.b16 %v1013
        %v1050 = vunpack.c.l.b16 %v1014
        %v1051 = vunpack.c.l.b16 %v1015
        %v1052 = vpack.c.b16 %v1037, %v1036
        %v1053 = vpack.c.b16 %v1039, %v1038
        %v1054 = vpack.c.b16 %v1041, %v1040
        %v1055 = vpack.c.b16 %v1043, %v1042
        %v1056 = vpack.c.b16 %v1045, %v1044
        %v1057 = vpack.c.b16 %v1047, %v1046
        %v1058 = vpack.c.b16 %v1049, %v1048
        %v1059 = vpack.c.b16 %v1051, %v1050
        %1068 = vmatprep.subr.bf16.mxu0 0
        %1069 = vmatpush1.bf16.msra.mxu0 %v1059
        %1070 = vmatprep.subr.bf16.mxu0 0
        %1071 = vmatpush1.bf16.msra.mxu0 %v1058
        %1072 = vmatprep.subr.bf16.mxu0 0
        %1073 = vmatpush1.bf16.msra.mxu0 %v1057
        %1074 = vmatprep.subr.bf16.mxu0 0
        %1075 = vmatpush1.bf16.msra.mxu0 %v1056
        %1076 = vmatprep.subr.bf16.mxu0 0
        %1077 = vmatpush1.bf16.msra.mxu0 %v1055
        %1078 = vmatprep.subr.bf16.mxu0 0
        %1079 = vmatpush1.bf16.msra.mxu0 %v1054
        %1080 = vmatprep.subr.bf16.mxu0 0
        %1081 = vmatpush1.bf16.msra.mxu0 %v1053
        %1082 = vmatprep.subr.bf16.mxu0 0
        %1083 = vmatpush1.bf16.msra.mxu0 %v1052
        %1084 = vmatprep.subr.bf16.mxu0 0
        %1085 = vmatpush2.bf16.msra.mxu0 0
        %1086 = vmatprep.subr.bf16.mxu0 0
        %1087 = vmatpush2.bf16.msra.mxu0 0
        %1088 = vmatprep.subr.bf16.mxu0 0
        %1089 = vmatpush2.bf16.msra.mxu0 0
        %1090 = vmatprep.subr.bf16.mxu0 0
        %1091 = vmatpush2.bf16.msra.mxu0 0
        %1092 = vmatprep.subr.bf16.mxu0 0
        %1093 = vmatpush2.bf16.msra.mxu0 0
        %1094 = vmatprep.subr.bf16.mxu0 0
        %1095 = vmatpush2.bf16.msra.mxu0 0
        %1096 = vmatprep.subr.bf16.mxu0 0
        %1097 = vmatpush2.bf16.msra.mxu0 0
        %1098 = vmatprep.subr.bf16.mxu0 0
        %1099 = vmatpush2.bf16.msra.mxu0 0
        %1100 = vmatprep.mubr.bf16.mxu0 0
        %1101 = vmatmul.mubr.bf16.gmra.mxu0 %v999
        %v1102 = vpop.f32.mrf.mxu0
        %v1103 = vadd.f32 %v1019, %v1102
        %v1104 = vpop.f32.mrf.mxu0
        %v1105 = vpop.f32.mrf.mxu0
        %v1106 = vpop.f32.mrf.mxu0
        %1107 = vdwg.mxu0
        %s1108 = scalar_lea.vmem %s6, 16
        %v1109 = vld [vmem:[%s1108] sm:$0xff]
        %v1110 = vld [vmem:[%s1108 + $0x8] sm:$0xff]
        %v1111 = vmul.f32 %v1103, %v1103
        %v1112 = vsel %vm327, %v1111, 0.0
        %1113 = vadd.xlane.f32.xlu0 %v1112
        %v1114 = vpop.xlane.xlu0 %1113
        %v1115 = vmul.f32 %v1114, %v331
        %v1116 = vadd.f32 %v1115, 1e-05
        %v1117 = vrsqrt.pop %v1116
        %v1118 = vmul.f32 %v1103, %v1117
        %v1119 = vpack.c.bf16 %v1118, %v1118
        %s1120 = scalar_lea.vmem [#allocation2], 128
        %v1121 = vld [vmem:[%s1120] sm:$0xff]
        %v1122 = vld [vmem:[%s1120 + $0x8] sm:$0xff]
        %v1123 = vld [vmem:[%s1120 + $0x10] sm:$0xff]
        %v1124 = vld [vmem:[%s1120 + $0x18] sm:$0xff]
        %v1125 = vld [vmem:[%s1120 + $0x20] sm:$0xff]
        %v1126 = vld [vmem:[%s1120 + $0x28] sm:$0xff]
        %v1127 = vld [vmem:[%s1120 + $0x30] sm:$0xff]
        %v1128 = vld [vmem:[%s1120 + $0x38] sm:$0xff]
        %v1129 = vld [vmem:[%s1120 + $0x40] sm:$0xff]
        %v1130 = vld [vmem:[%s1120 + $0x48] sm:$0xff]
        %v1131 = vld [vmem:[%s1120 + $0x50] sm:$0xff]
        %v1132 = vld [vmem:[%s1120 + $0x58] sm:$0xff]
        %v1133 = vld [vmem:[%s1120 + $0x60] sm:$0xff]
        %v1134 = vld [vmem:[%s1120 + $0x68] sm:$0xff]
        %v1135 = vld [vmem:[%s1120 + $0x70] sm:$0xff]
        %v1136 = vld [vmem:[%s1120 + $0x78] sm:$0xff]
        %v1139 = vlaneseq
        %v1140 = vshrl.u32 %v1139, 7
        %v1141 = vsub.s32 0, %v1140
        %v1142 = vrot.slane %v1109, %v1141
        %v1143 = vlaneseq
        %v1144 = vshrl.u32 %v1143, 7
        %v1145 = vsub.s32 4, %v1144
        %v1146 = vrot.slane %v1109, %v1145
        %v1147 = vlaneseq
        %v1148 = vshrl.u32 %v1147, 7
        %v1149 = vsub.s32 0, %v1148
        %v1150 = vrot.slane %v1110, %v1149
        %v1151 = vlaneseq
        %v1152 = vshrl.u32 %v1151, 7
        %v1153 = vsub.s32 4, %v1152
        %v1154 = vrot.slane %v1110, %v1153
        %v1159 = vlaneseq
        %v1160 = vshrl.u32 %v1159, 7
        %v1161 = vsub.s32 0, %v1160
        %v1162 = vrot.slane %v1142, %v1161
        %v1163 = vlaneseq
        %v1164 = vshrl.u32 %v1163, 7
        %v1165 = vsub.s32 0, %v1164
        %v1166 = vrot.slane %v1146, %v1165
        %v1167 = vlaneseq
        %v1168 = vshrl.u32 %v1167, 7
        %v1169 = vsub.s32 0, %v1168
        %v1170 = vrot.slane %v1150, %v1169
        %v1171 = vlaneseq
        %v1172 = vshrl.u32 %v1171, 7
        %v1173 = vsub.s32 0, %v1172
        %v1174 = vrot.slane %v1154, %v1173
        %v1191 = vunpack.c.l.b16 %v1121
        %v1192 = vunpack.c.h.b16 %v1121
        %v1193 = vunpack.c.l.b16 %v1122
        %v1194 = vunpack.c.h.b16 %v1122
        %v1195 = vunpack.c.l.b16 %v1123
        %v1196 = vunpack.c.h.b16 %v1123
        %v1197 = vunpack.c.l.b16 %v1124
        %v1198 = vunpack.c.h.b16 %v1124
        %v1199 = vunpack.c.l.b16 %v1125
        %v1200 = vunpack.c.h.b16 %v1125
        %v1201 = vunpack.c.l.b16 %v1126
        %v1202 = vunpack.c.h.b16 %v1126
        %v1203 = vunpack.c.l.b16 %v1127
        %v1204 = vunpack.c.h.b16 %v1127
        %v1205 = vunpack.c.l.b16 %v1128
        %v1206 = vunpack.c.h.b16 %v1128
        %v1207 = vunpack.c.l.b16 %v1129
        %v1208 = vunpack.c.h.b16 %v1129
        %v1209 = vunpack.c.l.b16 %v1130
        %v1210 = vunpack.c.h.b16 %v1130
        %v1211 = vunpack.c.l.b16 %v1131
        %v1212 = vunpack.c.h.b16 %v1131
        %v1213 = vunpack.c.l.b16 %v1132
        %v1214 = vunpack.c.h.b16 %v1132
        %v1215 = vunpack.c.l.b16 %v1133
        %v1216 = vunpack.c.h.b16 %v1133
        %v1217 = vunpack.c.l.b16 %v1134
        %v1218 = vunpack.c.h.b16 %v1134
        %v1219 = vunpack.c.l.b16 %v1135
        %v1220 = vunpack.c.h.b16 %v1135
        %v1221 = vunpack.c.l.b16 %v1136
        %v1222 = vunpack.c.h.b16 %v1136
        %v1223 = vpack.c.b16 %v1195, %v1191
        %v1224 = vpack.c.b16 %v1196, %v1192
        %v1225 = vpack.c.b16 %v1197, %v1193
        %v1226 = vpack.c.b16 %v1198, %v1194
        %v1227 = vpack.c.b16 %v1203, %v1199
        %v1228 = vpack.c.b16 %v1204, %v1200
        %v1229 = vpack.c.b16 %v1205, %v1201
        %v1230 = vpack.c.b16 %v1206, %v1202
        %v1231 = vpack.c.b16 %v1211, %v1207
        %v1232 = vpack.c.b16 %v1212, %v1208
        %v1233 = vpack.c.b16 %v1213, %v1209
        %v1234 = vpack.c.b16 %v1214, %v1210
        %v1235 = vpack.c.b16 %v1219, %v1215
        %v1236 = vpack.c.b16 %v1220, %v1216
        %v1237 = vpack.c.b16 %v1221, %v1217
        %v1238 = vpack.c.b16 %v1222, %v1218
        %v1256 = vsel %vm327, %v1119, 0
        %1258 = vmatprep.subr.bf16.mxu0 0
        %1259 = vmatpush1.bf16.msra.mxu0 0
        %1260 = vmatprep.subr.bf16.mxu0 0
        %1261 = vmatpush1.bf16.msra.mxu0 0
        %1262 = vmatprep.subr.bf16.mxu0 0
        %1263 = vmatpush1.bf16.msra.mxu0 0
        %1264 = vmatprep.subr.bf16.mxu0 0
        %1265 = vmatpush1.bf16.msra.mxu0 0
        %1266 = vmatprep.subr.bf16.mxu0 %v1236
        %1267 = vmatpush1.bf16.msra.mxu0 %v1235
        %1268 = vmatprep.subr.bf16.mxu0 %v1232
        %1269 = vmatpush1.bf16.msra.mxu0 %v1231
        %1270 = vmatprep.subr.bf16.mxu0 %v1228
        %1271 = vmatpush1.bf16.msra.mxu0 %v1227
        %1272 = vmatprep.subr.bf16.mxu0 %v1224
        %1273 = vmatpush1.bf16.msra.mxu0 %v1223
        %1274 = vmatprep.subr.bf16.mxu0 0
        %1275 = vmatpush2.bf16.msra.mxu0 0
        %1276 = vmatprep.subr.bf16.mxu0 0
        %1277 = vmatpush2.bf16.msra.mxu0 0
        %1278 = vmatprep.subr.bf16.mxu0 0
        %1279 = vmatpush2.bf16.msra.mxu0 0
        %1280 = vmatprep.subr.bf16.mxu0 0
        %1281 = vmatpush2.bf16.msra.mxu0 0
        %1282 = vmatprep.subr.bf16.mxu0 0
        %1283 = vmatpush2.bf16.msra.mxu0 0
        %1284 = vmatprep.subr.bf16.mxu0 0
        %1285 = vmatpush2.bf16.msra.mxu0 0
        %1286 = vmatprep.subr.bf16.mxu0 0
        %1287 = vmatpush2.bf16.msra.mxu0 0
        %1288 = vmatprep.subr.bf16.mxu0 0
        %1289 = vmatpush2.bf16.msra.mxu0 0
        %1290 = vmatprep.mubr.bf16.mxu0 0
        %1291 = vmatmul.mubr.bf16.gmra.mxu0 %v1256
        %v1292 = vpop.f32.mrf.mxu0
        %v1293 = vadd.f32 %v1162, %v1292
        %v1294 = vpop.f32.mrf.mxu0
        %v1295 = vadd.f32 %v1166, %v1294
        %v1296 = vpop.f32.mrf.mxu0
        %v1297 = vpop.f32.mrf.mxu0
        %1298 = vdwg.mxu0
        %1299 = vmatprep.subr.bf16.mxu0 0
        %1300 = vmatpush1.bf16.msra.mxu0 0
        %1301 = vmatprep.subr.bf16.mxu0 0
        %1302 = vmatpush1.bf16.msra.mxu0 0
        %1303 = vmatprep.subr.bf16.mxu0 0
        %1304 = vmatpush1.bf16.msra.mxu0 0
        %1305 = vmatprep.subr.bf16.mxu0 0
        %1306 = vmatpush1.bf16.msra.mxu0 0
        %1307 = vmatprep.subr.bf16.mxu0 %v1238
        %1308 = vmatpush1.bf16.msra.mxu0 %v1237
        %1309 = vmatprep.subr.bf16.mxu0 %v1234
        %1310 = vmatpush1.bf16.msra.mxu0 %v1233
        %1311 = vmatprep.subr.bf16.mxu0 %v1230
        %1312 = vmatpush1.bf16.msra.mxu0 %v1229
        %1313 = vmatprep.subr.bf16.mxu0 %v1226
        %1314 = vmatpush1.bf16.msra.mxu0 %v1225
        %1315 = vmatprep.subr.bf16.mxu0 0
        %1316 = vmatpush2.bf16.msra.mxu0 0
        %1317 = vmatprep.subr.bf16.mxu0 0
        %1318 = vmatpush2.bf16.msra.mxu0 0
        %1319 = vmatprep.subr.bf16.mxu0 0
        %1320 = vmatpush2.bf16.msra.mxu0 0
        %1321 = vmatprep.subr.bf16.mxu0 0
        %1322 = vmatpush2.bf16.msra.mxu0 0
        %1323 = vmatprep.subr.bf16.mxu0 0
        %1324 = vmatpush2.bf16.msra.mxu0 0
        %1325 = vmatprep.subr.bf16.mxu0 0
        %1326 = vmatpush2.bf16.msra.mxu0 0
        %1327 = vmatprep.subr.bf16.mxu0 0
        %1328 = vmatpush2.bf16.msra.mxu0 0
        %1329 = vmatprep.subr.bf16.mxu0 0
        %1330 = vmatpush2.bf16.msra.mxu0 0
        %1331 = vmatprep.mubr.bf16.mxu0 0
        %1332 = vmatmul.mubr.bf16.gmra.mxu0 %v1256
        %v1333 = vpop.f32.mrf.mxu0
        %v1334 = vadd.f32 %v1170, %v1333
        %v1335 = vpop.f32.mrf.mxu0
        %v1336 = vadd.f32 %v1174, %v1335
        %v1337 = vpop.f32.mrf.mxu0
        %v1338 = vpop.f32.mrf.mxu0
        %1339 = vdwg.mxu0
        %1340 = vset.pattern.permute.xlu0 4
        %1341 = vperm.xlu0 %1340, %v323
        %v1342 = vpop.permute.xlu0 %1341
        %v1344 = vmul.f32 %v1342, %v1295
        %1345 = vset.pattern.permute.xlu0 5
        %1346 = vperm.xlu0 %1345, %v323
        %v1347 = vpop.permute.xlu0 %1346
        %v1349 = vmul.f32 %v1347, %v1293
        %v1350 = vadd.f32 %v1344, %v1349
        %1351 = vset.pattern.permute.xlu0 6
        %1352 = vperm.xlu0 %1351, %v323
        %v1353 = vpop.permute.xlu0 %1352
        %v1355 = vmul.f32 %v1353, %v1334
        %v1356 = vadd.f32 %v1350, %v1355
        %1357 = vset.pattern.permute.xlu0 7
        %1358 = vperm.xlu0 %1357, %v323
        %v1359 = vpop.permute.xlu0 %1358
        %v1361 = vadd.f32 %v1356, %v1359
        %v1362 = vxor.u32 %v1361, 2147483648
        %v1363 = vmul.f32 %v1362, 1.442695
        %v1364 = vpow.pop %v1363
        %v1365 = vadd.f32 %v1364, 1.0
        %v1366 = vrcp.pop %v1365
        %v1367 = vmul.f32 1.0, %v1366
        %v1368 = vmul.f32 %v1361, %v1367
        %v1369 = vpack.c.bf16 %v1368, %v1368
        %s1370 = scalar_lea.vmem %s3, 64
        %v1371 = vld [vmem:[%s1370] sm:$0xf]
        %v1372 = vld [vmem:[%s1370 + $0x4] sm:$0xf]
        %v1373 = vld [vmem:[%s1370 + $0x8] sm:$0xf]
        %v1374 = vld [vmem:[%s1370 + $0xc] sm:$0xf]
        %v1375 = vld [vmem:[%s1370 + $0x10] sm:$0xf]
        %v1376 = vld [vmem:[%s1370 + $0x14] sm:$0xf]
        %v1377 = vld [vmem:[%s1370 + $0x18] sm:$0xf]
        %v1378 = vld [vmem:[%s1370 + $0x1c] sm:$0xf]
        %v1379 = vld [vmem:[%s1370 + $0x20] sm:$0xf]
        %v1380 = vld [vmem:[%s1370 + $0x24] sm:$0xf]
        %v1381 = vld [vmem:[%s1370 + $0x28] sm:$0xf]
        %v1382 = vld [vmem:[%s1370 + $0x2c] sm:$0xf]
        %v1383 = vld [vmem:[%s1370 + $0x30] sm:$0xf]
        %v1384 = vld [vmem:[%s1370 + $0x34] sm:$0xf]
        %v1385 = vld [vmem:[%s1370 + $0x38] sm:$0xf]
        %v1386 = vld [vmem:[%s1370 + $0x3c] sm:$0xf]
        %v1387 = vlaneseq
        %v1388 = vshrl.u32 %v1387, 7
        %v1389 = vsub.s32 1, %v1388
        %v1390 = vrot.slane %v1109, %v1389
        %v1407 = vunpack.c.l.b16 %v1371
        %v1408 = vunpack.c.l.b16 %v1372
        %v1409 = vunpack.c.l.b16 %v1373
        %v1410 = vunpack.c.l.b16 %v1374
        %v1411 = vunpack.c.l.b16 %v1375
        %v1412 = vunpack.c.l.b16 %v1376
        %v1413 = vunpack.c.l.b16 %v1377
        %v1414 = vunpack.c.l.b16 %v1378
        %v1415 = vunpack.c.l.b16 %v1379
        %v1416 = vunpack.c.l.b16 %v1380
        %v1417 = vunpack.c.l.b16 %v1381
        %v1418 = vunpack.c.l.b16 %v1382
        %v1419 = vunpack.c.l.b16 %v1383
        %v1420 = vunpack.c.l.b16 %v1384
        %v1421 = vunpack.c.l.b16 %v1385
        %v1422 = vunpack.c.l.b16 %v1386
        %v1423 = vpack.c.b16 %v1408, %v1407
        %v1424 = vpack.c.b16 %v1410, %v1409
        %v1425 = vpack.c.b16 %v1412, %v1411
        %v1426 = vpack.c.b16 %v1414, %v1413
        %v1427 = vpack.c.b16 %v1416, %v1415
        %v1428 = vpack.c.b16 %v1418, %v1417
        %v1429 = vpack.c.b16 %v1420, %v1419
        %v1430 = vpack.c.b16 %v1422, %v1421
        %1439 = vmatprep.subr.bf16.mxu0 0
        %1440 = vmatpush1.bf16.msra.mxu0 %v1430
        %1441 = vmatprep.subr.bf16.mxu0 0
        %1442 = vmatpush1.bf16.msra.mxu0 %v1429
        %1443 = vmatprep.subr.bf16.mxu0 0
        %1444 = vmatpush1.bf16.msra.mxu0 %v1428
        %1445 = vmatprep.subr.bf16.mxu0 0
        %1446 = vmatpush1.bf16.msra.mxu0 %v1427
        %1447 = vmatprep.subr.bf16.mxu0 0
        %1448 = vmatpush1.bf16.msra.mxu0 %v1426
        %1449 = vmatprep.subr.bf16.mxu0 0
        %1450 = vmatpush1.bf16.msra.mxu0 %v1425
        %1451 = vmatprep.subr.bf16.mxu0 0
        %1452 = vmatpush1.bf16.msra.mxu0 %v1424
        %1453 = vmatprep.subr.bf16.mxu0 0
        %1454 = vmatpush1.bf16.msra.mxu0 %v1423
        %1455 = vmatprep.subr.bf16.mxu0 0
        %1456 = vmatpush2.bf16.msra.mxu0 0
        %1457 = vmatprep.subr.bf16.mxu0 0
        %1458 = vmatpush2.bf16.msra.mxu0 0
        %1459 = vmatprep.subr.bf16.mxu0 0
        %1460 = vmatpush2.bf16.msra.mxu0 0
        %1461 = vmatprep.subr.bf16.mxu0 0
        %1462 = vmatpush2.bf16.msra.mxu0 0
        %1463 = vmatprep.subr.bf16.mxu0 0
        %1464 = vmatpush2.bf16.msra.mxu0 0
        %1465 = vmatprep.subr.bf16.mxu0 0
        %1466 = vmatpush2.bf16.msra.mxu0 0
        %1467 = vmatprep.subr.bf16.mxu0 0
        %1468 = vmatpush2.bf16.msra.mxu0 0
        %1469 = vmatprep.subr.bf16.mxu0 0
        %1470 = vmatpush2.bf16.msra.mxu0 0
        %1471 = vmatprep.mubr.bf16.mxu0 0
        %1472 = vmatmul.mubr.bf16.gmra.mxu0 %v1369
        %v1473 = vpop.f32.mrf.mxu0
        %v1474 = vadd.f32 %v1390, %v1473
        %v1475 = vpop.f32.mrf.mxu0
        %v1476 = vpop.f32.mrf.mxu0
        %v1477 = vpop.f32.mrf.mxu0
        %1478 = vdwg.mxu0
        %v1479 = vpack.c.bf16 %v1474, %v1474
        %s1480 = scalar_lea.vmem [#allocation5], 192
        %v1481 = vld [vmem:[%s1480] sm:$0xff]
        %v1482 = vld [vmem:[%s1480 + $0x8] sm:$0xf]
        %v1483 = vld [vmem:[%s1480 + $0xc] sm:$0xff]
        %v1484 = vld [vmem:[%s1480 + $0x14] sm:$0xf]
        %v1485 = vld [vmem:[%s1480 + $0x18] sm:$0xff]
        %v1486 = vld [vmem:[%s1480 + $0x20] sm:$0xf]
        %v1487 = vld [vmem:[%s1480 + $0x24] sm:$0xff]
        %v1488 = vld [vmem:[%s1480 + $0x2c] sm:$0xf]
        %v1489 = vld [vmem:[%s1480 + $0x30] sm:$0xff]
        %v1490 = vld [vmem:[%s1480 + $0x38] sm:$0xf]
        %v1491 = vld [vmem:[%s1480 + $0x3c] sm:$0xff]
        %v1492 = vld [vmem:[%s1480 + $0x44] sm:$0xf]
        %v1493 = vld [vmem:[%s1480 + $0x48] sm:$0xff]
        %v1494 = vld [vmem:[%s1480 + $0x50] sm:$0xf]
        %v1495 = vld [vmem:[%s1480 + $0x54] sm:$0xff]
        %v1496 = vld [vmem:[%s1480 + $0x5c] sm:$0xf]
        %v1497 = vld [vmem:[%s1480 + $0x60] sm:$0xff]
        %v1498 = vld [vmem:[%s1480 + $0x68] sm:$0xf]
        %v1499 = vld [vmem:[%s1480 + $0x6c] sm:$0xff]
        %v1500 = vld [vmem:[%s1480 + $0x74] sm:$0xf]
        %v1501 = vld [vmem:[%s1480 + $0x78] sm:$0xff]
        %v1502 = vld [vmem:[%s1480 + $0x80] sm:$0xf]
        %v1503 = vld [vmem:[%s1480 + $0x84] sm:$0xff]
        %v1504 = vld [vmem:[%s1480 + $0x8c] sm:$0xf]
        %v1505 = vld [vmem:[%s1480 + $0x90] sm:$0xff]
        %v1506 = vld [vmem:[%s1480 + $0x98] sm:$0xf]
        %v1507 = vld [vmem:[%s1480 + $0x9c] sm:$0xff]
        %v1508 = vld [vmem:[%s1480 + $0xa4] sm:$0xf]
        %v1509 = vld [vmem:[%s1480 + $0xa8] sm:$0xff]
        %v1510 = vld [vmem:[%s1480 + $0xb0] sm:$0xf]
        %v1511 = vld [vmem:[%s1480 + $0xb4] sm:$0xff]
        %v1512 = vld [vmem:[%s1480 + $0xbc] sm:$0xf]
        %v1513 = vlaneseq
        %v1514 = vshrl.u32 %v1513, 7
        %v1515 = vsub.s32 2, %v1514
        %v1516 = vrot.slane %v1109, %v1515
        %v1517 = vlaneseq
        %v1518 = vshrl.u32 %v1517, 7
        %v1519 = vsub.s32 6, %v1518
        %v1520 = vrot.slane %v1109, %v1519
        %v1521 = vlaneseq
        %v1522 = vshrl.u32 %v1521, 7
        %v1523 = vsub.s32 2, %v1522
        %v1524 = vrot.slane %v1110, %v1523
        %v1528 = vlaneseq
        %v1529 = vshrl.u32 %v1528, 7
        %v1530 = vsub.s32 2, %v1529
        %v1531 = vrot.slane %v1516, %v1530
        %v1532 = vlaneseq
        %v1533 = vshrl.u32 %v1532, 7
        %v1534 = vsub.s32 2, %v1533
        %v1535 = vrot.slane %v1520, %v1534
        %v1536 = vlaneseq
        %v1537 = vshrl.u32 %v1536, 7
        %v1538 = vsub.s32 2, %v1537
        %v1539 = vrot.slane %v1524, %v1538
        %v1572 = vunpack.c.l.b16 %v1481
        %v1573 = vunpack.c.h.b16 %v1481
        %v1574 = vunpack.c.l.b16 %v1482
        %v1575 = vunpack.c.l.b16 %v1483
        %v1576 = vunpack.c.h.b16 %v1483
        %v1577 = vunpack.c.l.b16 %v1484
        %v1578 = vunpack.c.l.b16 %v1485
        %v1579 = vunpack.c.h.b16 %v1485
        %v1580 = vunpack.c.l.b16 %v1486
        %v1581 = vunpack.c.l.b16 %v1487
        %v1582 = vunpack.c.h.b16 %v1487
        %v1583 = vunpack.c.l.b16 %v1488
        %v1584 = vunpack.c.l.b16 %v1489
        %v1585 = vunpack.c.h.b16 %v1489
        %v1586 = vunpack.c.l.b16 %v1490
        %v1587 = vunpack.c.l.b16 %v1491
        %v1588 = vunpack.c.h.b16 %v1491
        %v1589 = vunpack.c.l.b16 %v1492
        %v1590 = vunpack.c.l.b16 %v1493
        %v1591 = vunpack.c.h.b16 %v1493
        %v1592 = vunpack.c.l.b16 %v1494
        %v1593 = vunpack.c.l.b16 %v1495
        %v1594 = vunpack.c.h.b16 %v1495
        %v1595 = vunpack.c.l.b16 %v1496
        %v1596 = vunpack.c.l.b16 %v1497
        %v1597 = vunpack.c.h.b16 %v1497
        %v1598 = vunpack.c.l.b16 %v1498
        %v1599 = vunpack.c.l.b16 %v1499
        %v1600 = vunpack.c.h.b16 %v1499
        %v1601 = vunpack.c.l.b16 %v1500
        %v1602 = vunpack.c.l.b16 %v1501
        %v1603 = vunpack.c.h.b16 %v1501
        %v1604 = vunpack.c.l.b16 %v1502
        %v1605 = vunpack.c.l.b16 %v1503
        %v1606 = vunpack.c.h.b16 %v1503
        %v1607 = vunpack.c.l.b16 %v1504
        %v1608 = vunpack.c.l.b16 %v1505
        %v1609 = vunpack.c.h.b16 %v1505
        %v1610 = vunpack.c.l.b16 %v1506
        %v1611 = vunpack.c.l.b16 %v1507
        %v1612 = vunpack.c.h.b16 %v1507
        %v1613 = vunpack.c.l.b16 %v1508
        %v1614 = vunpack.c.l.b16 %v1509
        %v1615 = vunpack.c.h.b16 %v1509
        %v1616 = vunpack.c.l.b16 %v1510
        %v1617 = vunpack.c.l.b16 %v1511
        %v1618 = vunpack.c.h.b16 %v1511
        %v1619 = vunpack.c.l.b16 %v1512
        %v1620 = vpack.c.b16 %v1575, %v1572
        %v1621 = vpack.c.b16 %v1576, %v1573
        %v1622 = vpack.c.b16 %v1577, %v1574
        %v1623 = vpack.c.b16 %v1581, %v1578
        %v1624 = vpack.c.b16 %v1582, %v1579
        %v1625 = vpack.c.b16 %v1583, %v1580
        %v1626 = vpack.c.b16 %v1587, %v1584
        %v1627 = vpack.c.b16 %v1588, %v1585
        %v1628 = vpack.c.b16 %v1589, %v1586
        %v1629 = vpack.c.b16 %v1593, %v1590
        %v1630 = vpack.c.b16 %v1594, %v1591
        %v1631 = vpack.c.b16 %v1595, %v1592
        %v1632 = vpack.c.b16 %v1599, %v1596
        %v1633 = vpack.c.b16 %v1600, %v1597
        %v1634 = vpack.c.b16 %v1601, %v1598
        %v1635 = vpack.c.b16 %v1605, %v1602
        %v1636 = vpack.c.b16 %v1606, %v1603
        %v1637 = vpack.c.b16 %v1607, %v1604
        %v1638 = vpack.c.b16 %v1611, %v1608
        %v1639 = vpack.c.b16 %v1612, %v1609
        %v1640 = vpack.c.b16 %v1613, %v1610
        %v1641 = vpack.c.b16 %v1617, %v1614
        %v1642 = vpack.c.b16 %v1618, %v1615
        %v1643 = vpack.c.b16 %v1619, %v1616
        %1668 = vmatprep.subr.bf16.mxu0 %v1642
        %1669 = vmatpush1.bf16.msra.mxu0 %v1641
        %1670 = vmatprep.subr.bf16.mxu0 %v1639
        %1671 = vmatpush1.bf16.msra.mxu0 %v1638
        %1672 = vmatprep.subr.bf16.mxu0 %v1636
        %1673 = vmatpush1.bf16.msra.mxu0 %v1635
        %1674 = vmatprep.subr.bf16.mxu0 %v1633
        %1675 = vmatpush1.bf16.msra.mxu0 %v1632
        %1676 = vmatprep.subr.bf16.mxu0 %v1630
        %1677 = vmatpush1.bf16.msra.mxu0 %v1629
        %1678 = vmatprep.subr.bf16.mxu0 %v1627
        %1679 = vmatpush1.bf16.msra.mxu0 %v1626
        %1680 = vmatprep.subr.bf16.mxu0 %v1624
        %1681 = vmatpush1.bf16.msra.mxu0 %v1623
        %1682 = vmatprep.subr.bf16.mxu0 %v1621
        %1683 = vmatpush1.bf16.msra.mxu0 %v1620
        %1684 = vmatprep.subr.bf16.mxu0 0
        %1685 = vmatpush2.bf16.msra.mxu0 0
        %1686 = vmatprep.subr.bf16.mxu0 0
        %1687 = vmatpush2.bf16.msra.mxu0 0
        %1688 = vmatprep.subr.bf16.mxu0 0
        %1689 = vmatpush2.bf16.msra.mxu0 0
        %1690 = vmatprep.subr.bf16.mxu0 0
        %1691 = vmatpush2.bf16.msra.mxu0 0
        %1692 = vmatprep.subr.bf16.mxu0 0
        %1693 = vmatpush2.bf16.msra.mxu0 0
        %1694 = vmatprep.subr.bf16.mxu0 0
        %1695 = vmatpush2.bf16.msra.mxu0 0
        %1696 = vmatprep.subr.bf16.mxu0 0
        %1697 = vmatpush2.bf16.msra.mxu0 0
        %1698 = vmatprep.subr.bf16.mxu0 0
        %1699 = vmatpush2.bf16.msra.mxu0 0
        %1700 = vmatprep.mubr.bf16.mxu0 0
        %1701 = vmatmul.mubr.bf16.gmra.mxu0 %v1479
        %v1702 = vpop.f32.mrf.mxu0
        %v1703 = vadd.f32 %v1531, %v1702
        %v1704 = vpop.f32.mrf.mxu0
        %v1705 = vadd.f32 %v1535, %v1704
        %v1706 = vpop.f32.mrf.mxu0
        %v1707 = vpop.f32.mrf.mxu0
        %1708 = vdwg.mxu0
        %1709 = vmatprep.subr.bf16.mxu0 0
        %1710 = vmatpush1.bf16.msra.mxu0 %v1643
        %1711 = vmatprep.subr.bf16.mxu0 0
        %1712 = vmatpush1.bf16.msra.mxu0 %v1640
        %1713 = vmatprep.subr.bf16.mxu0 0
        %1714 = vmatpush1.bf16.msra.mxu0 %v1637
        %1715 = vmatprep.subr.bf16.mxu0 0
        %1716 = vmatpush1.bf16.msra.mxu0 %v1634
        %1717 = vmatprep.subr.bf16.mxu0 0
        %1718 = vmatpush1.bf16.msra.mxu0 %v1631
        %1719 = vmatprep.subr.bf16.mxu0 0
        %1720 = vmatpush1.bf16.msra.mxu0 %v1628
        %1721 = vmatprep.subr.bf16.mxu0 0
        %1722 = vmatpush1.bf16.msra.mxu0 %v1625
        %1723 = vmatprep.subr.bf16.mxu0 0
        %1724 = vmatpush1.bf16.msra.mxu0 %v1622
        %1725 = vmatprep.subr.bf16.mxu0 0
        %1726 = vmatpush2.bf16.msra.mxu0 0
        %1727 = vmatprep.subr.bf16.mxu0 0
        %1728 = vmatpush2.bf16.msra.mxu0 0
        %1729 = vmatprep.subr.bf16.mxu0 0
        %1730 = vmatpush2.bf16.msra.mxu0 0
        %1731 = vmatprep.subr.bf16.mxu0 0
        %1732 = vmatpush2.bf16.msra.mxu0 0
        %1733 = vmatprep.subr.bf16.mxu0 0
        %1734 = vmatpush2.bf16.msra.mxu0 0
        %1735 = vmatprep.subr.bf16.mxu0 0
        %1736 = vmatpush2.bf16.msra.mxu0 0
        %1737 = vmatprep.subr.bf16.mxu0 0
        %1738 = vmatpush2.bf16.msra.mxu0 0
        %1739 = vmatprep.subr.bf16.mxu0 0
        %1740 = vmatpush2.bf16.msra.mxu0 0
        %1741 = vmatprep.mubr.bf16.mxu0 0
        %1742 = vmatmul.mubr.bf16.gmra.mxu0 %v1479
        %v1743 = vpop.f32.mrf.mxu0
        %v1744 = vadd.f32 %v1539, %v1743
        %v1745 = vpop.f32.mrf.mxu0
        %v1746 = vpop.f32.mrf.mxu0
        %v1747 = vpop.f32.mrf.mxu0
        %1748 = vdwg.mxu0
        %v1749 = vmax.f32 %v1703, 0.0
        %v1750 = vand.u32 2147483647, %v1703
        %v1751 = vsub.f32 0.0, %v1750
        %v1752 = vmul.f32 %v1751, 1.442695
        %v1753 = vpow.pop %v1752
        %v1754 = vadd.f32 %v1753, 1.0
        %v1755 = vlog2.pop %v1754
        %v1756 = vmul.f32 %v1755, 0.6931472
        %v1757 = vmul.f32 -0.5, %v1753
        %v1758 = vadd.f32 %v1757, 1.0
        %v1759 = vmul.f32 %v1758, %v1753
        %v1760 = vand.u32 2147483647, %v1753
        %vm1761 = vcmp.lt.f32.partialorder %v1760, 0.0004427343
        %v1762 = vsel %vm1761, %v1759, %v1756
        %v1763 = vadd.f32 %v1749, %v1762
        %v1764 = vmul.f32 %v1705, %v1744
        %1765 = vadd.xlane.f32.xlu0 %v1764
        %v1766 = vpop.xlane.xlu0 %1765
        %v1767 = vmul.f32 %v1474, %v1763
        %v1768 = vmul.f32 %v1767, %v1766
        %v1769 = vxor.u32 %v1768, 2147483648
        %v1770 = vmul.f32 %v1769, 1.442695
        %v1771 = vpow.pop %v1770
        %v1772 = vadd.f32 %v1771, 1.0
        %v1773 = vrcp.pop %v1772
        %v1774 = vmul.f32 1.0, %v1773
        %v1775 = vmul.f32 %v1768, %v1774
        %v1776 = vxor.u32 %v1336, 2147483648
        %v1777 = vmul.f32 %v1776, 1.442695
        %v1778 = vpow.pop %v1777
        %v1779 = vadd.f32 %v1778, 1.0
        %v1780 = vrcp.pop %v1779
        %v1781 = vmul.f32 1.0, %v1780
        %v1782 = vmul.f32 %v1336, %v1781
        %v1783 = vmul.f32 %v1775, %v1782
        %v1784 = vpack.c.bf16 %v1783, %v1783
        %s1785 = scalar_lea.vmem %s5, 64
        %v1786 = vld [vmem:[%s1785] sm:$0xf]
        %v1787 = vld [vmem:[%s1785 + $0x4] sm:$0xf]
        %v1788 = vld [vmem:[%s1785 + $0x8] sm:$0xf]
        %v1789 = vld [vmem:[%s1785 + $0xc] sm:$0xf]
        %v1790 = vld [vmem:[%s1785 + $0x10] sm:$0xf]
        %v1791 = vld [vmem:[%s1785 + $0x14] sm:$0xf]
        %v1792 = vld [vmem:[%s1785 + $0x18] sm:$0xf]
        %v1793 = vld [vmem:[%s1785 + $0x1c] sm:$0xf]
        %v1794 = vld [vmem:[%s1785 + $0x20] sm:$0xf]
        %v1795 = vld [vmem:[%s1785 + $0x24] sm:$0xf]
        %v1796 = vld [vmem:[%s1785 + $0x28] sm:$0xf]
        %v1797 = vld [vmem:[%s1785 + $0x2c] sm:$0xf]
        %v1798 = vld [vmem:[%s1785 + $0x30] sm:$0xf]
        %v1799 = vld [vmem:[%s1785 + $0x34] sm:$0xf]
        %v1800 = vld [vmem:[%s1785 + $0x38] sm:$0xf]
        %v1801 = vld [vmem:[%s1785 + $0x3c] sm:$0xf]
        %v1802 = vlaneseq
        %v1803 = vshrl.u32 %v1802, 7
        %v1804 = vsub.s32 3, %v1803
        %v1805 = vrot.slane %v1109, %v1804
        %v1822 = vunpack.c.l.b16 %v1786
        %v1823 = vunpack.c.l.b16 %v1787
        %v1824 = vunpack.c.l.b16 %v1788
        %v1825 = vunpack.c.l.b16 %v1789
        %v1826 = vunpack.c.l.b16 %v1790
        %v1827 = vunpack.c.l.b16 %v1791
        %v1828 = vunpack.c.l.b16 %v1792
        %v1829 = vunpack.c.l.b16 %v1793
        %v1830 = vunpack.c.l.b16 %v1794
        %v1831 = vunpack.c.l.b16 %v1795
        %v1832 = vunpack.c.l.b16 %v1796
        %v1833 = vunpack.c.l.b16 %v1797
        %v1834 = vunpack.c.l.b16 %v1798
        %v1835 = vunpack.c.l.b16 %v1799
        %v1836 = vunpack.c.l.b16 %v1800
        %v1837 = vunpack.c.l.b16 %v1801
        %v1838 = vpack.c.b16 %v1823, %v1822
        %v1839 = vpack.c.b16 %v1825, %v1824
        %v1840 = vpack.c.b16 %v1827, %v1826
        %v1841 = vpack.c.b16 %v1829, %v1828
        %v1842 = vpack.c.b16 %v1831, %v1830
        %v1843 = vpack.c.b16 %v1833, %v1832
        %v1844 = vpack.c.b16 %v1835, %v1834
        %v1845 = vpack.c.b16 %v1837, %v1836
        %1854 = vmatprep.subr.bf16.mxu0 0
        %1855 = vmatpush1.bf16.msra.mxu0 %v1845
        %1856 = vmatprep.subr.bf16.mxu0 0
        %1857 = vmatpush1.bf16.msra.mxu0 %v1844
        %1858 = vmatprep.subr.bf16.mxu0 0
        %1859 = vmatpush1.bf16.msra.mxu0 %v1843
        %1860 = vmatprep.subr.bf16.mxu0 0
        %1861 = vmatpush1.bf16.msra.mxu0 %v1842
        %1862 = vmatprep.subr.bf16.mxu0 0
        %1863 = vmatpush1.bf16.msra.mxu0 %v1841
        %1864 = vmatprep.subr.bf16.mxu0 0
        %1865 = vmatpush1.bf16.msra.mxu0 %v1840
        %1866 = vmatprep.subr.bf16.mxu0 0
        %1867 = vmatpush1.bf16.msra.mxu0 %v1839
        %1868 = vmatprep.subr.bf16.mxu0 0
        %1869 = vmatpush1.bf16.msra.mxu0 %v1838
        %1870 = vmatprep.subr.bf16.mxu0 0
        %1871 = vmatpush2.bf16.msra.mxu0 0
        %1872 = vmatprep.subr.bf16.mxu0 0
        %1873 = vmatpush2.bf16.msra.mxu0 0
        %1874 = vmatprep.subr.bf16.mxu0 0
        %1875 = vmatpush2.bf16.msra.mxu0 0
        %1876 = vmatprep.subr.bf16.mxu0 0
        %1877 = vmatpush2.bf16.msra.mxu0 0
        %1878 = vmatprep.subr.bf16.mxu0 0
        %1879 = vmatpush2.bf16.msra.mxu0 0
        %1880 = vmatprep.subr.bf16.mxu0 0
        %1881 = vmatpush2.bf16.msra.mxu0 0
        %1882 = vmatprep.subr.bf16.mxu0 0
        %1883 = vmatpush2.bf16.msra.mxu0 0
        %1884 = vmatprep.subr.bf16.mxu0 0
        %1885 = vmatpush2.bf16.msra.mxu0 0
        %1886 = vmatprep.mubr.bf16.mxu0 0
        %1887 = vmatmul.mubr.bf16.gmra.mxu0 %v1784
        %v1888 = vpop.f32.mrf.mxu0
        %v1889 = vadd.f32 %v1805, %v1888
        %v1890 = vpop.f32.mrf.mxu0
        %v1891 = vpop.f32.mrf.mxu0
        %v1892 = vpop.f32.mrf.mxu0
        %1893 = vdwg.mxu0
        %s1894 = scalar_lea.vmem %s6, 32
        %v1895 = vld [vmem:[%s1894] sm:$0xff]
        %v1896 = vld [vmem:[%s1894 + $0x8] sm:$0xff]
        %v1897 = vmul.f32 %v1889, %v1889
        %v1898 = vsel %vm327, %v1897, 0.0
        %1899 = vadd.xlane.f32.xlu0 %v1898
        %v1900 = vpop.xlane.xlu0 %1899
        %v1901 = vmul.f32 %v1900, %v331
        %v1902 = vadd.f32 %v1901, 1e-05
        %v1903 = vrsqrt.pop %v1902
        %v1904 = vmul.f32 %v1889, %v1903
        %v1905 = vpack.c.bf16 %v1904, %v1904
        %s1906 = scalar_lea.vmem [#allocation2], 256
        %v1907 = vld [vmem:[%s1906] sm:$0xff]
        %v1908 = vld [vmem:[%s1906 + $0x8] sm:$0xff]
        %v1909 = vld [vmem:[%s1906 + $0x10] sm:$0xff]
        %v1910 = vld [vmem:[%s1906 + $0x18] sm:$0xff]
        %v1911 = vld [vmem:[%s1906 + $0x20] sm:$0xff]
        %v1912 = vld [vmem:[%s1906 + $0x28] sm:$0xff]
        %v1913 = vld [vmem:[%s1906 + $0x30] sm:$0xff]
        %v1914 = vld [vmem:[%s1906 + $0x38] sm:$0xff]
        %v1915 = vld [vmem:[%s1906 + $0x40] sm:$0xff]
        %v1916 = vld [vmem:[%s1906 + $0x48] sm:$0xff]
        %v1917 = vld [vmem:[%s1906 + $0x50] sm:$0xff]
        %v1918 = vld [vmem:[%s1906 + $0x58] sm:$0xff]
        %v1919 = vld [vmem:[%s1906 + $0x60] sm:$0xff]
        %v1920 = vld [vmem:[%s1906 + $0x68] sm:$0xff]
        %v1921 = vld [vmem:[%s1906 + $0x70] sm:$0xff]
        %v1922 = vld [vmem:[%s1906 + $0x78] sm:$0xff]
        %v1925 = vlaneseq
        %v1926 = vshrl.u32 %v1925, 7
        %v1927 = vsub.s32 0, %v1926
        %v1928 = vrot.slane %v1895, %v1927
        %v1929 = vlaneseq
        %v1930 = vshrl.u32 %v1929, 7
        %v1931 = vsub.s32 4, %v1930
        %v1932 = vrot.slane %v1895, %v1931
        %v1933 = vlaneseq
        %v1934 = vshrl.u32 %v1933, 7
        %v1935 = vsub.s32 0, %v1934
        %v1936 = vrot.slane %v1896, %v1935
        %v1937 = vlaneseq
        %v1938 = vshrl.u32 %v1937, 7
        %v1939 = vsub.s32 4, %v1938
        %v1940 = vrot.slane %v1896, %v1939
        %v1945 = vlaneseq
        %v1946 = vshrl.u32 %v1945, 7
        %v1947 = vsub.s32 0, %v1946
        %v1948 = vrot.slane %v1928, %v1947
        %v1949 = vlaneseq
        %v1950 = vshrl.u32 %v1949, 7
        %v1951 = vsub.s32 0, %v1950
        %v1952 = vrot.slane %v1932, %v1951
        %v1953 = vlaneseq
        %v1954 = vshrl.u32 %v1953, 7
        %v1955 = vsub.s32 0, %v1954
        %v1956 = vrot.slane %v1936, %v1955
        %v1957 = vlaneseq
        %v1958 = vshrl.u32 %v1957, 7
        %v1959 = vsub.s32 0, %v1958
        %v1960 = vrot.slane %v1940, %v1959
        %v1977 = vunpack.c.l.b16 %v1907
        %v1978 = vunpack.c.h.b16 %v1907
        %v1979 = vunpack.c.l.b16 %v1908
        %v1980 = vunpack.c.h.b16 %v1908
        %v1981 = vunpack.c.l.b16 %v1909
        %v1982 = vunpack.c.h.b16 %v1909
        %v1983 = vunpack.c.l.b16 %v1910
        %v1984 = vunpack.c.h.b16 %v1910
        %v1985 = vunpack.c.l.b16 %v1911
        %v1986 = vunpack.c.h.b16 %v1911
        %v1987 = vunpack.c.l.b16 %v1912
        %v1988 = vunpack.c.h.b16 %v1912
        %v1989 = vunpack.c.l.b16 %v1913
        %v1990 = vunpack.c.h.b16 %v1913
        %v1991 = vunpack.c.l.b16 %v1914
        %v1992 = vunpack.c.h.b16 %v1914
        %v1993 = vunpack.c.l.b16 %v1915
        %v1994 = vunpack.c.h.b16 %v1915
        %v1995 = vunpack.c.l.b16 %v1916
        %v1996 = vunpack.c.h.b16 %v1916
        %v1997 = vunpack.c.l.b16 %v1917
        %v1998 = vunpack.c.h.b16 %v1917
        %v1999 = vunpack.c.l.b16 %v1918
        %v2000 = vunpack.c.h.b16 %v1918
        %v2001 = vunpack.c.l.b16 %v1919
        %v2002 = vunpack.c.h.b16 %v1919
        %v2003 = vunpack.c.l.b16 %v1920
        %v2004 = vunpack.c.h.b16 %v1920
        %v2005 = vunpack.c.l.b16 %v1921
        %v2006 = vunpack.c.h.b16 %v1921
        %v2007 = vunpack.c.l.b16 %v1922
        %v2008 = vunpack.c.h.b16 %v1922
        %v2009 = vpack.c.b16 %v1981, %v1977
        %v2010 = vpack.c.b16 %v1982, %v1978
        %v2011 = vpack.c.b16 %v1983, %v1979
        %v2012 = vpack.c.b16 %v1984, %v1980
        %v2013 = vpack.c.b16 %v1989, %v1985
        %v2014 = vpack.c.b16 %v1990, %v1986
        %v2015 = vpack.c.b16 %v1991, %v1987
        %v2016 = vpack.c.b16 %v1992, %v1988
        %v2017 = vpack.c.b16 %v1997, %v1993
        %v2018 = vpack.c.b16 %v1998, %v1994
        %v2019 = vpack.c.b16 %v1999, %v1995
        %v2020 = vpack.c.b16 %v2000, %v1996
        %v2021 = vpack.c.b16 %v2005, %v2001
        %v2022 = vpack.c.b16 %v2006, %v2002
        %v2023 = vpack.c.b16 %v2007, %v2003
        %v2024 = vpack.c.b16 %v2008, %v2004
        %v2042 = vsel %vm327, %v1905, 0
        %2044 = vmatprep.subr.bf16.mxu0 0
        %2045 = vmatpush1.bf16.msra.mxu0 0
        %2046 = vmatprep.subr.bf16.mxu0 0
        %2047 = vmatpush1.bf16.msra.mxu0 0
        %2048 = vmatprep.subr.bf16.mxu0 0
        %2049 = vmatpush1.bf16.msra.mxu0 0
        %2050 = vmatprep.subr.bf16.mxu0 0
        %2051 = vmatpush1.bf16.msra.mxu0 0
        %2052 = vmatprep.subr.bf16.mxu0 %v2022
        %2053 = vmatpush1.bf16.msra.mxu0 %v2021
        %2054 = vmatprep.subr.bf16.mxu0 %v2018
        %2055 = vmatpush1.bf16.msra.mxu0 %v2017
        %2056 = vmatprep.subr.bf16.mxu0 %v2014
        %2057 = vmatpush1.bf16.msra.mxu0 %v2013
        %2058 = vmatprep.subr.bf16.mxu0 %v2010
        %2059 = vmatpush1.bf16.msra.mxu0 %v2009
        %2060 = vmatprep.subr.bf16.mxu0 0
        %2061 = vmatpush2.bf16.msra.mxu0 0
        %2062 = vmatprep.subr.bf16.mxu0 0
        %2063 = vmatpush2.bf16.msra.mxu0 0
        %2064 = vmatprep.subr.bf16.mxu0 0
        %2065 = vmatpush2.bf16.msra.mxu0 0
        %2066 = vmatprep.subr.bf16.mxu0 0
        %2067 = vmatpush2.bf16.msra.mxu0 0
        %2068 = vmatprep.subr.bf16.mxu0 0
        %2069 = vmatpush2.bf16.msra.mxu0 0
        %2070 = vmatprep.subr.bf16.mxu0 0
        %2071 = vmatpush2.bf16.msra.mxu0 0
        %2072 = vmatprep.subr.bf16.mxu0 0
        %2073 = vmatpush2.bf16.msra.mxu0 0
        %2074 = vmatprep.subr.bf16.mxu0 0
        %2075 = vmatpush2.bf16.msra.mxu0 0
        %2076 = vmatprep.mubr.bf16.mxu0 0
        %2077 = vmatmul.mubr.bf16.gmra.mxu0 %v2042
        %v2078 = vpop.f32.mrf.mxu0
        %v2079 = vadd.f32 %v1948, %v2078
        %v2080 = vpop.f32.mrf.mxu0
        %v2081 = vadd.f32 %v1952, %v2080
        %v2082 = vpop.f32.mrf.mxu0
        %v2083 = vpop.f32.mrf.mxu0
        %2084 = vdwg.mxu0
        %2085 = vmatprep.subr.bf16.mxu0 0
        %2086 = vmatpush1.bf16.msra.mxu0 0
        %2087 = vmatprep.subr.bf16.mxu0 0
        %2088 = vmatpush1.bf16.msra.mxu0 0
        %2089 = vmatprep.subr.bf16.mxu0 0
        %2090 = vmatpush1.bf16.msra.mxu0 0
        %2091 = vmatprep.subr.bf16.mxu0 0
        %2092 = vmatpush1.bf16.msra.mxu0 0
        %2093 = vmatprep.subr.bf16.mxu0 %v2024
        %2094 = vmatpush1.bf16.msra.mxu0 %v2023
        %2095 = vmatprep.subr.bf16.mxu0 %v2020
        %2096 = vmatpush1.bf16.msra.mxu0 %v2019
        %2097 = vmatprep.subr.bf16.mxu0 %v2016
        %2098 = vmatpush1.bf16.msra.mxu0 %v2015
        %2099 = vmatprep.subr.bf16.mxu0 %v2012
        %2100 = vmatpush1.bf16.msra.mxu0 %v2011
        %2101 = vmatprep.subr.bf16.mxu0 0
        %2102 = vmatpush2.bf16.msra.mxu0 0
        %2103 = vmatprep.subr.bf16.mxu0 0
        %2104 = vmatpush2.bf16.msra.mxu0 0
        %2105 = vmatprep.subr.bf16.mxu0 0
        %2106 = vmatpush2.bf16.msra.mxu0 0
        %2107 = vmatprep.subr.bf16.mxu0 0
        %2108 = vmatpush2.bf16.msra.mxu0 0
        %2109 = vmatprep.subr.bf16.mxu0 0
        %2110 = vmatpush2.bf16.msra.mxu0 0
        %2111 = vmatprep.subr.bf16.mxu0 0
        %2112 = vmatpush2.bf16.msra.mxu0 0
        %2113 = vmatprep.subr.bf16.mxu0 0
        %2114 = vmatpush2.bf16.msra.mxu0 0
        %2115 = vmatprep.subr.bf16.mxu0 0
        %2116 = vmatpush2.bf16.msra.mxu0 0
        %2117 = vmatprep.mubr.bf16.mxu0 0
        %2118 = vmatmul.mubr.bf16.gmra.mxu0 %v2042
        %v2119 = vpop.f32.mrf.mxu0
        %v2120 = vadd.f32 %v1956, %v2119
        %v2121 = vpop.f32.mrf.mxu0
        %v2122 = vadd.f32 %v1960, %v2121
        %v2123 = vpop.f32.mrf.mxu0
        %v2124 = vpop.f32.mrf.mxu0
        %2125 = vdwg.mxu0
        %2126 = vset.pattern.permute.xlu0 8
        %2127 = vperm.xlu0 %2126, %v323
        %v2128 = vpop.permute.xlu0 %2127
        %v2130 = vmul.f32 %v2128, %v2081
        %2131 = vset.pattern.permute.xlu0 9
        %2132 = vperm.xlu0 %2131, %v323
        %v2133 = vpop.permute.xlu0 %2132
        %v2135 = vmul.f32 %v2133, %v2079
        %v2136 = vadd.f32 %v2130, %v2135
        %2137 = vset.pattern.permute.xlu0 10
        %2138 = vperm.xlu0 %2137, %v323
        %v2139 = vpop.permute.xlu0 %2138
        %v2141 = vmul.f32 %v2139, %v2120
        %v2142 = vadd.f32 %v2136, %v2141
        %2143 = vset.pattern.permute.xlu0 11
        %2144 = vperm.xlu0 %2143, %v323
        %v2145 = vpop.permute.xlu0 %2144
        %v2147 = vadd.f32 %v2142, %v2145
        %v2148 = vxor.u32 %v2147, 2147483648
        %v2149 = vmul.f32 %v2148, 1.442695
        %v2150 = vpow.pop %v2149
        %v2151 = vadd.f32 %v2150, 1.0
        %v2152 = vrcp.pop %v2151
        %v2153 = vmul.f32 1.0, %v2152
        %v2154 = vmul.f32 %v2147, %v2153
        %v2155 = vpack.c.bf16 %v2154, %v2154
        %s2156 = scalar_lea.vmem %s3, 128
        %v2157 = vld [vmem:[%s2156] sm:$0xf]
        %v2158 = vld [vmem:[%s2156 + $0x4] sm:$0xf]
        %v2159 = vld [vmem:[%s2156 + $0x8] sm:$0xf]
        %v2160 = vld [vmem:[%s2156 + $0xc] sm:$0xf]
        %v2161 = vld [vmem:[%s2156 + $0x10] sm:$0xf]
        %v2162 = vld [vmem:[%s2156 + $0x14] sm:$0xf]
        %v2163 = vld [vmem:[%s2156 + $0x18] sm:$0xf]
        %v2164 = vld [vmem:[%s2156 + $0x1c] sm:$0xf]
        %v2165 = vld [vmem:[%s2156 + $0x20] sm:$0xf]
        %v2166 = vld [vmem:[%s2156 + $0x24] sm:$0xf]
        %v2167 = vld [vmem:[%s2156 + $0x28] sm:$0xf]
        %v2168 = vld [vmem:[%s2156 + $0x2c] sm:$0xf]
        %v2169 = vld [vmem:[%s2156 + $0x30] sm:$0xf]
        %v2170 = vld [vmem:[%s2156 + $0x34] sm:$0xf]
        %v2171 = vld [vmem:[%s2156 + $0x38] sm:$0xf]
        %v2172 = vld [vmem:[%s2156 + $0x3c] sm:$0xf]
        %v2173 = vlaneseq
        %v2174 = vshrl.u32 %v2173, 7
        %v2175 = vsub.s32 1, %v2174
        %v2176 = vrot.slane %v1895, %v2175
        %v2193 = vunpack.c.l.b16 %v2157
        %v2194 = vunpack.c.l.b16 %v2158
        %v2195 = vunpack.c.l.b16 %v2159
        %v2196 = vunpack.c.l.b16 %v2160
        %v2197 = vunpack.c.l.b16 %v2161
        %v2198 = vunpack.c.l.b16 %v2162
        %v2199 = vunpack.c.l.b16 %v2163
        %v2200 = vunpack.c.l.b16 %v2164
        %v2201 = vunpack.c.l.b16 %v2165
        %v2202 = vunpack.c.l.b16 %v2166
        %v2203 = vunpack.c.l.b16 %v2167
        %v2204 = vunpack.c.l.b16 %v2168
        %v2205 = vunpack.c.l.b16 %v2169
        %v2206 = vunpack.c.l.b16 %v2170
        %v2207 = vunpack.c.l.b16 %v2171
        %v2208 = vunpack.c.l.b16 %v2172
        %v2209 = vpack.c.b16 %v2194, %v2193
        %v2210 = vpack.c.b16 %v2196, %v2195
        %v2211 = vpack.c.b16 %v2198, %v2197
        %v2212 = vpack.c.b16 %v2200, %v2199
        %v2213 = vpack.c.b16 %v2202, %v2201
        %v2214 = vpack.c.b16 %v2204, %v2203
        %v2215 = vpack.c.b16 %v2206, %v2205
        %v2216 = vpack.c.b16 %v2208, %v2207
        %2225 = vmatprep.subr.bf16.mxu0 0
        %2226 = vmatpush1.bf16.msra.mxu0 %v2216
        %2227 = vmatprep.subr.bf16.mxu0 0
        %2228 = vmatpush1.bf16.msra.mxu0 %v2215
        %2229 = vmatprep.subr.bf16.mxu0 0
        %2230 = vmatpush1.bf16.msra.mxu0 %v2214
        %2231 = vmatprep.subr.bf16.mxu0 0
        %2232 = vmatpush1.bf16.msra.mxu0 %v2213
        %2233 = vmatprep.subr.bf16.mxu0 0
        %2234 = vmatpush1.bf16.msra.mxu0 %v2212
        %2235 = vmatprep.subr.bf16.mxu0 0
        %2236 = vmatpush1.bf16.msra.mxu0 %v2211
        %2237 = vmatprep.subr.bf16.mxu0 0
        %2238 = vmatpush1.bf16.msra.mxu0 %v2210
        %2239 = vmatprep.subr.bf16.mxu0 0
        %2240 = vmatpush1.bf16.msra.mxu0 %v2209
        %2241 = vmatprep.subr.bf16.mxu0 0
        %2242 = vmatpush2.bf16.msra.mxu0 0
        %2243 = vmatprep.subr.bf16.mxu0 0
        %2244 = vmatpush2.bf16.msra.mxu0 0
        %2245 = vmatprep.subr.bf16.mxu0 0
        %2246 = vmatpush2.bf16.msra.mxu0 0
        %2247 = vmatprep.subr.bf16.mxu0 0
        %2248 = vmatpush2.bf16.msra.mxu0 0
        %2249 = vmatprep.subr.bf16.mxu0 0
        %2250 = vmatpush2.bf16.msra.mxu0 0
        %2251 = vmatprep.subr.bf16.mxu0 0
        %2252 = vmatpush2.bf16.msra.mxu0 0
        %2253 = vmatprep.subr.bf16.mxu0 0
        %2254 = vmatpush2.bf16.msra.mxu0 0
        %2255 = vmatprep.subr.bf16.mxu0 0
        %2256 = vmatpush2.bf16.msra.mxu0 0
        %2257 = vmatprep.mubr.bf16.mxu0 0
        %2258 = vmatmul.mubr.bf16.gmra.mxu0 %v2155
        %v2259 = vpop.f32.mrf.mxu0
        %v2260 = vadd.f32 %v2176, %v2259
        %v2261 = vpop.f32.mrf.mxu0
        %v2262 = vpop.f32.mrf.mxu0
        %v2263 = vpop.f32.mrf.mxu0
        %2264 = vdwg.mxu0
        %v2265 = vpack.c.bf16 %v2260, %v2260
        %s2266 = scalar_lea.vmem [#allocation5], 384
        %v2267 = vld [vmem:[%s2266] sm:$0xff]
        %v2268 = vld [vmem:[%s2266 + $0x8] sm:$0xf]
        %v2269 = vld [vmem:[%s2266 + $0xc] sm:$0xff]
        %v2270 = vld [vmem:[%s2266 + $0x14] sm:$0xf]
        %v2271 = vld [vmem:[%s2266 + $0x18] sm:$0xff]
        %v2272 = vld [vmem:[%s2266 + $0x20] sm:$0xf]
        %v2273 = vld [vmem:[%s2266 + $0x24] sm:$0xff]
        %v2274 = vld [vmem:[%s2266 + $0x2c] sm:$0xf]
        %v2275 = vld [vmem:[%s2266 + $0x30] sm:$0xff]
        %v2276 = vld [vmem:[%s2266 + $0x38] sm:$0xf]
        %v2277 = vld [vmem:[%s2266 + $0x3c] sm:$0xff]
        %v2278 = vld [vmem:[%s2266 + $0x44] sm:$0xf]
        %v2279 = vld [vmem:[%s2266 + $0x48] sm:$0xff]
        %v2280 = vld [vmem:[%s2266 + $0x50] sm:$0xf]
        %v2281 = vld [vmem:[%s2266 + $0x54] sm:$0xff]
        %v2282 = vld [vmem:[%s2266 + $0x5c] sm:$0xf]
        %v2283 = vld [vmem:[%s2266 + $0x60] sm:$0xff]
        %v2284 = vld [vmem:[%s2266 + $0x68] sm:$0xf]
        %v2285 = vld [vmem:[%s2266 + $0x6c] sm:$0xff]
        %v2286 = vld [vmem:[%s2266 + $0x74] sm:$0xf]
        %v2287 = vld [vmem:[%s2266 + $0x78] sm:$0xff]
        %v2288 = vld [vmem:[%s2266 + $0x80] sm:$0xf]
        %v2289 = vld [vmem:[%s2266 + $0x84] sm:$0xff]
        %v2290 = vld [vmem:[%s2266 + $0x8c] sm:$0xf]
        %v2291 = vld [vmem:[%s2266 + $0x90] sm:$0xff]
        %v2292 = vld [vmem:[%s2266 + $0x98] sm:$0xf]
        %v2293 = vld [vmem:[%s2266 + $0x9c] sm:$0xff]
        %v2294 = vld [vmem:[%s2266 + $0xa4] sm:$0xf]
        %v2295 = vld [vmem:[%s2266 + $0xa8] sm:$0xff]
        %v2296 = vld [vmem:[%s2266 + $0xb0] sm:$0xf]
        %v2297 = vld [vmem:[%s2266 + $0xb4] sm:$0xff]
        %v2298 = vld [vmem:[%s2266 + $0xbc] sm:$0xf]
        %v2299 = vlaneseq
        %v2300 = vshrl.u32 %v2299, 7
        %v2301 = vsub.s32 2, %v2300
        %v2302 = vrot.slane %v1895, %v2301
        %v2303 = vlaneseq
        %v2304 = vshrl.u32 %v2303, 7
        %v2305 = vsub.s32 6, %v2304
        %v2306 = vrot.slane %v1895, %v2305
        %v2307 = vlaneseq
        %v2308 = vshrl.u32 %v2307, 7
        %v2309 = vsub.s32 2, %v2308
        %v2310 = vrot.slane %v1896, %v2309
        %v2314 = vlaneseq
        %v2315 = vshrl.u32 %v2314, 7
        %v2316 = vsub.s32 2, %v2315
        %v2317 = vrot.slane %v2302, %v2316
        %v2318 = vlaneseq
        %v2319 = vshrl.u32 %v2318, 7
        %v2320 = vsub.s32 2, %v2319
        %v2321 = vrot.slane %v2306, %v2320
        %v2322 = vlaneseq
        %v2323 = vshrl.u32 %v2322, 7
        %v2324 = vsub.s32 2, %v2323
        %v2325 = vrot.slane %v2310, %v2324
        %v2358 = vunpack.c.l.b16 %v2267
        %v2359 = vunpack.c.h.b16 %v2267
        %v2360 = vunpack.c.l.b16 %v2268
        %v2361 = vunpack.c.l.b16 %v2269
        %v2362 = vunpack.c.h.b16 %v2269
        %v2363 = vunpack.c.l.b16 %v2270
        %v2364 = vunpack.c.l.b16 %v2271
        %v2365 = vunpack.c.h.b16 %v2271
        %v2366 = vunpack.c.l.b16 %v2272
        %v2367 = vunpack.c.l.b16 %v2273
        %v2368 = vunpack.c.h.b16 %v2273
        %v2369 = vunpack.c.l.b16 %v2274
        %v2370 = vunpack.c.l.b16 %v2275
        %v2371 = vunpack.c.h.b16 %v2275
        %v2372 = vunpack.c.l.b16 %v2276
        %v2373 = vunpack.c.l.b16 %v2277
        %v2374 = vunpack.c.h.b16 %v2277
        %v2375 = vunpack.c.l.b16 %v2278
        %v2376 = vunpack.c.l.b16 %v2279
        %v2377 = vunpack.c.h.b16 %v2279
        %v2378 = vunpack.c.l.b16 %v2280
        %v2379 = vunpack.c.l.b16 %v2281
        %v2380 = vunpack.c.h.b16 %v2281
        %v2381 = vunpack.c.l.b16 %v2282
        %v2382 = vunpack.c.l.b16 %v2283
        %v2383 = vunpack.c.h.b16 %v2283
        %v2384 = vunpack.c.l.b16 %v2284
        %v2385 = vunpack.c.l.b16 %v2285
        %v2386 = vunpack.c.h.b16 %v2285
        %v2387 = vunpack.c.l.b16 %v2286
        %v2388 = vunpack.c.l.b16 %v2287
        %v2389 = vunpack.c.h.b16 %v2287
        %v2390 = vunpack.c.l.b16 %v2288
        %v2391 = vunpack.c.l.b16 %v2289
        %v2392 = vunpack.c.h.b16 %v2289
        %v2393 = vunpack.c.l.b16 %v2290
        %v2394 = vunpack.c.l.b16 %v2291
        %v2395 = vunpack.c.h.b16 %v2291
        %v2396 = vunpack.c.l.b16 %v2292
        %v2397 = vunpack.c.l.b16 %v2293
        %v2398 = vunpack.c.h.b16 %v2293
        %v2399 = vunpack.c.l.b16 %v2294
        %v2400 = vunpack.c.l.b16 %v2295
        %v2401 = vunpack.c.h.b16 %v2295
        %v2402 = vunpack.c.l.b16 %v2296
        %v2403 = vunpack.c.l.b16 %v2297
        %v2404 = vunpack.c.h.b16 %v2297
        %v2405 = vunpack.c.l.b16 %v2298
        %v2406 = vpack.c.b16 %v2361, %v2358
        %v2407 = vpack.c.b16 %v2362, %v2359
        %v2408 = vpack.c.b16 %v2363, %v2360
        %v2409 = vpack.c.b16 %v2367, %v2364
        %v2410 = vpack.c.b16 %v2368, %v2365
        %v2411 = vpack.c.b16 %v2369, %v2366
        %v2412 = vpack.c.b16 %v2373, %v2370
        %v2413 = vpack.c.b16 %v2374, %v2371
        %v2414 = vpack.c.b16 %v2375, %v2372
        %v2415 = vpack.c.b16 %v2379, %v2376
        %v2416 = vpack.c.b16 %v2380, %v2377
        %v2417 = vpack.c.b16 %v2381, %v2378
        %v2418 = vpack.c.b16 %v2385, %v2382
        %v2419 = vpack.c.b16 %v2386, %v2383
        %v2420 = vpack.c.b16 %v2387, %v2384
        %v2421 = vpack.c.b16 %v2391, %v2388
        %v2422 = vpack.c.b16 %v2392, %v2389
        %v2423 = vpack.c.b16 %v2393, %v2390
        %v2424 = vpack.c.b16 %v2397, %v2394
        %v2425 = vpack.c.b16 %v2398, %v2395
        %v2426 = vpack.c.b16 %v2399, %v2396
        %v2427 = vpack.c.b16 %v2403, %v2400
        %v2428 = vpack.c.b16 %v2404, %v2401
        %v2429 = vpack.c.b16 %v2405, %v2402
        %2454 = vmatprep.subr.bf16.mxu0 %v2428
        %2455 = vmatpush1.bf16.msra.mxu0 %v2427
        %2456 = vmatprep.subr.bf16.mxu0 %v2425
        %2457 = vmatpush1.bf16.msra.mxu0 %v2424
        %2458 = vmatprep.subr.bf16.mxu0 %v2422
        %2459 = vmatpush1.bf16.msra.mxu0 %v2421
        %2460 = vmatprep.subr.bf16.mxu0 %v2419
        %2461 = vmatpush1.bf16.msra.mxu0 %v2418
        %2462 = vmatprep.subr.bf16.mxu0 %v2416
        %2463 = vmatpush1.bf16.msra.mxu0 %v2415
        %2464 = vmatprep.subr.bf16.mxu0 %v2413
        %2465 = vmatpush1.bf16.msra.mxu0 %v2412
        %2466 = vmatprep.subr.bf16.mxu0 %v2410
        %2467 = vmatpush1.bf16.msra.mxu0 %v2409
        %2468 = vmatprep.subr.bf16.mxu0 %v2407
        %2469 = vmatpush1.bf16.msra.mxu0 %v2406
        %2470 = vmatprep.subr.bf16.mxu0 0
        %2471 = vmatpush2.bf16.msra.mxu0 0
        %2472 = vmatprep.subr.bf16.mxu0 0
        %2473 = vmatpush2.bf16.msra.mxu0 0
        %2474 = vmatprep.subr.bf16.mxu0 0
        %2475 = vmatpush2.bf16.msra.mxu0 0
        %2476 = vmatprep.subr.bf16.mxu0 0
        %2477 = vmatpush2.bf16.msra.mxu0 0
        %2478 = vmatprep.subr.bf16.mxu0 0
        %2479 = vmatpush2.bf16.msra.mxu0 0
        %2480 = vmatprep.subr.bf16.mxu0 0
        %2481 = vmatpush2.bf16.msra.mxu0 0
        %2482 = vmatprep.subr.bf16.mxu0 0
        %2483 = vmatpush2.bf16.msra.mxu0 0
        %2484 = vmatprep.subr.bf16.mxu0 0
        %2485 = vmatpush2.bf16.msra.mxu0 0
        %2486 = vmatprep.mubr.bf16.mxu0 0
        %2487 = vmatmul.mubr.bf16.gmra.mxu0 %v2265
        %v2488 = vpop.f32.mrf.mxu0
        %v2489 = vadd.f32 %v2317, %v2488
        %v2490 = vpop.f32.mrf.mxu0
        %v2491 = vadd.f32 %v2321, %v2490
        %v2492 = vpop.f32.mrf.mxu0
        %v2493 = vpop.f32.mrf.mxu0
        %2494 = vdwg.mxu0
        %2495 = vmatprep.subr.bf16.mxu0 0
        %2496 = vmatpush1.bf16.msra.mxu0 %v2429
        %2497 = vmatprep.subr.bf16.mxu0 0
        %2498 = vmatpush1.bf16.msra.mxu0 %v2426
        %2499 = vmatprep.subr.bf16.mxu0 0
        %2500 = vmatpush1.bf16.msra.mxu0 %v2423
        %2501 = vmatprep.subr.bf16.mxu0 0
        %2502 = vmatpush1.bf16.msra.mxu0 %v2420
        %2503 = vmatprep.subr.bf16.mxu0 0
        %2504 = vmatpush1.bf16.msra.mxu0 %v2417
        %2505 = vmatprep.subr.bf16.mxu0 0
        %2506 = vmatpush1.bf16.msra.mxu0 %v2414
        %2507 = vmatprep.subr.bf16.mxu0 0
        %2508 = vmatpush1.bf16.msra.mxu0 %v2411
        %2509 = vmatprep.subr.bf16.mxu0 0
        %2510 = vmatpush1.bf16.msra.mxu0 %v2408
        %2511 = vmatprep.subr.bf16.mxu0 0
        %2512 = vmatpush2.bf16.msra.mxu0 0
        %2513 = vmatprep.subr.bf16.mxu0 0
        %2514 = vmatpush2.bf16.msra.mxu0 0
        %2515 = vmatprep.subr.bf16.mxu0 0
        %2516 = vmatpush2.bf16.msra.mxu0 0
        %2517 = vmatprep.subr.bf16.mxu0 0
        %2518 = vmatpush2.bf16.msra.mxu0 0
        %2519 = vmatprep.subr.bf16.mxu0 0
        %2520 = vmatpush2.bf16.msra.mxu0 0
        %2521 = vmatprep.subr.bf16.mxu0 0
        %2522 = vmatpush2.bf16.msra.mxu0 0
        %2523 = vmatprep.subr.bf16.mxu0 0
        %2524 = vmatpush2.bf16.msra.mxu0 0
        %2525 = vmatprep.subr.bf16.mxu0 0
        %2526 = vmatpush2.bf16.msra.mxu0 0
        %2527 = vmatprep.mubr.bf16.mxu0 0
        %2528 = vmatmul.mubr.bf16.gmra.mxu0 %v2265
        %v2529 = vpop.f32.mrf.mxu0
        %v2530 = vadd.f32 %v2325, %v2529
        %v2531 = vpop.f32.mrf.mxu0
        %v2532 = vpop.f32.mrf.mxu0
        %v2533 = vpop.f32.mrf.mxu0
        %2534 = vdwg.mxu0
        %v2535 = vmax.f32 %v2489, 0.0
        %v2536 = vand.u32 2147483647, %v2489
        %v2537 = vsub.f32 0.0, %v2536
        %v2538 = vmul.f32 %v2537, 1.442695
        %v2539 = vpow.pop %v2538
        %v2540 = vadd.f32 %v2539, 1.0
        %v2541 = vlog2.pop %v2540
        %v2542 = vmul.f32 %v2541, 0.6931472
        %v2543 = vmul.f32 -0.5, %v2539
        %v2544 = vadd.f32 %v2543, 1.0
        %v2545 = vmul.f32 %v2544, %v2539
        %v2546 = vand.u32 2147483647, %v2539
        %vm2547 = vcmp.lt.f32.partialorder %v2546, 0.0004427343
        %v2548 = vsel %vm2547, %v2545, %v2542
        %v2549 = vadd.f32 %v2535, %v2548
        %v2550 = vmul.f32 %v2491, %v2530
        %2551 = vadd.xlane.f32.xlu0 %v2550
        %v2552 = vpop.xlane.xlu0 %2551
        %v2553 = vmul.f32 %v2260, %v2549
        %v2554 = vmul.f32 %v2553, %v2552
        %v2555 = vxor.u32 %v2554, 2147483648
        %v2556 = vmul.f32 %v2555, 1.442695
        %v2557 = vpow.pop %v2556
        %v2558 = vadd.f32 %v2557, 1.0
        %v2559 = vrcp.pop %v2558
        %v2560 = vmul.f32 1.0, %v2559
        %v2561 = vmul.f32 %v2554, %v2560
        %v2562 = vxor.u32 %v2122, 2147483648
        %v2563 = vmul.f32 %v2562, 1.442695
        %v2564 = vpow.pop %v2563
        %v2565 = vadd.f32 %v2564, 1.0
        %v2566 = vrcp.pop %v2565
        %v2567 = vmul.f32 1.0, %v2566
        %v2568 = vmul.f32 %v2122, %v2567
        %v2569 = vmul.f32 %v2561, %v2568
        %v2570 = vpack.c.bf16 %v2569, %v2569
        %s2571 = scalar_lea.vmem %s5, 128
        %v2572 = vld [vmem:[%s2571] sm:$0xf]
        %v2573 = vld [vmem:[%s2571 + $0x4] sm:$0xf]
        %v2574 = vld [vmem:[%s2571 + $0x8] sm:$0xf]
        %v2575 = vld [vmem:[%s2571 + $0xc] sm:$0xf]
        %v2576 = vld [vmem:[%s2571 + $0x10] sm:$0xf]
        %v2577 = vld [vmem:[%s2571 + $0x14] sm:$0xf]
        %v2578 = vld [vmem:[%s2571 + $0x18] sm:$0xf]
        %v2579 = vld [vmem:[%s2571 + $0x1c] sm:$0xf]
        %v2580 = vld [vmem:[%s2571 + $0x20] sm:$0xf]
        %v2581 = vld [vmem:[%s2571 + $0x24] sm:$0xf]
        %v2582 = vld [vmem:[%s2571 + $0x28] sm:$0xf]
        %v2583 = vld [vmem:[%s2571 + $0x2c] sm:$0xf]
        %v2584 = vld [vmem:[%s2571 + $0x30] sm:$0xf]
        %v2585 = vld [vmem:[%s2571 + $0x34] sm:$0xf]
        %v2586 = vld [vmem:[%s2571 + $0x38] sm:$0xf]
        %v2587 = vld [vmem:[%s2571 + $0x3c] sm:$0xf]
        %v2588 = vlaneseq
        %v2589 = vshrl.u32 %v2588, 7
        %v2590 = vsub.s32 3, %v2589
        %v2591 = vrot.slane %v1895, %v2590
        %v2608 = vunpack.c.l.b16 %v2572
        %v2609 = vunpack.c.l.b16 %v2573
        %v2610 = vunpack.c.l.b16 %v2574
        %v2611 = vunpack.c.l.b16 %v2575
        %v2612 = vunpack.c.l.b16 %v2576
        %v2613 = vunpack.c.l.b16 %v2577
        %v2614 = vunpack.c.l.b16 %v2578
        %v2615 = vunpack.c.l.b16 %v2579
        %v2616 = vunpack.c.l.b16 %v2580
        %v2617 = vunpack.c.l.b16 %v2581
        %v2618 = vunpack.c.l.b16 %v2582
        %v2619 = vunpack.c.l.b16 %v2583
        %v2620 = vunpack.c.l.b16 %v2584
        %v2621 = vunpack.c.l.b16 %v2585
        %v2622 = vunpack.c.l.b16 %v2586
        %v2623 = vunpack.c.l.b16 %v2587
        %v2624 = vpack.c.b16 %v2609, %v2608
        %v2625 = vpack.c.b16 %v2611, %v2610
        %v2626 = vpack.c.b16 %v2613, %v2612
        %v2627 = vpack.c.b16 %v2615, %v2614
        %v2628 = vpack.c.b16 %v2617, %v2616
        %v2629 = vpack.c.b16 %v2619, %v2618
        %v2630 = vpack.c.b16 %v2621, %v2620
        %v2631 = vpack.c.b16 %v2623, %v2622
        %2640 = vmatprep.subr.bf16.mxu0 0
        %2641 = vmatpush1.bf16.msra.mxu0 %v2631
        %2642 = vmatprep.subr.bf16.mxu0 0
        %2643 = vmatpush1.bf16.msra.mxu0 %v2630
        %2644 = vmatprep.subr.bf16.mxu0 0
        %2645 = vmatpush1.bf16.msra.mxu0 %v2629
        %2646 = vmatprep.subr.bf16.mxu0 0
        %2647 = vmatpush1.bf16.msra.mxu0 %v2628
        %2648 = vmatprep.subr.bf16.mxu0 0
        %2649 = vmatpush1.bf16.msra.mxu0 %v2627
        %2650 = vmatprep.subr.bf16.mxu0 0
        %2651 = vmatpush1.bf16.msra.mxu0 %v2626
        %2652 = vmatprep.subr.bf16.mxu0 0
        %2653 = vmatpush1.bf16.msra.mxu0 %v2625
        %2654 = vmatprep.subr.bf16.mxu0 0
        %2655 = vmatpush1.bf16.msra.mxu0 %v2624
        %2656 = vmatprep.subr.bf16.mxu0 0
        %2657 = vmatpush2.bf16.msra.mxu0 0
        %2658 = vmatprep.subr.bf16.mxu0 0
        %2659 = vmatpush2.bf16.msra.mxu0 0
        %2660 = vmatprep.subr.bf16.mxu0 0
        %2661 = vmatpush2.bf16.msra.mxu0 0
        %2662 = vmatprep.subr.bf16.mxu0 0
        %2663 = vmatpush2.bf16.msra.mxu0 0
        %2664 = vmatprep.subr.bf16.mxu0 0
        %2665 = vmatpush2.bf16.msra.mxu0 0
        %2666 = vmatprep.subr.bf16.mxu0 0
        %2667 = vmatpush2.bf16.msra.mxu0 0
        %2668 = vmatprep.subr.bf16.mxu0 0
        %2669 = vmatpush2.bf16.msra.mxu0 0
        %2670 = vmatprep.subr.bf16.mxu0 0
        %2671 = vmatpush2.bf16.msra.mxu0 0
        %2672 = vmatprep.mubr.bf16.mxu0 0
        %2673 = vmatmul.mubr.bf16.gmra.mxu0 %v2570
        %v2674 = vpop.f32.mrf.mxu0
        %v2675 = vadd.f32 %v2591, %v2674
        %v2676 = vpop.f32.mrf.mxu0
        %v2677 = vpop.f32.mrf.mxu0
        %v2678 = vpop.f32.mrf.mxu0
        %2679 = vdwg.mxu0
        %2680 = vst.msk [vmem:[%s312] sm:$0xff] %vm327, %v2675
        %s2681 = sand.u32 %s188, 1
        %s2682 = scalar_lea.sflag [#allocation4], %s2681
        %s2683 = sand.u32 %s188, 1
        %s2684 = smul.addr %s2683, 8
        %s2685 = scalar_lea.vmem [#allocation7], %s2684
        // Predicated region
        $region57: #{mamba_forward.1} parent=47 // pred_check
          %p2686 = pneg %p198
        $region58: #{mamba_forward.1} parent=47 // pred_check_branch
          %2688 = sbr.rel (%p2686) target = $region60
        $region59: #{mamba_forward.1} parent=47 // pred_region
          %s2690 = ssub.s32 128, 128
          %2691 = vsyncadd %s2682, %s2690
          %s2692 = smul.addr %s23, 128
          %s2693 = scalar_lea.hbm %s7, %s2692
          %s2695 = sshll.u32 %s2685, 4
          %s2696 = int_to_ptr.vmem [resolvable:$true] %s2695
          %2698 = dma.vmem_to_hbm [thread:$0]  %s2696, 128, %s2693, %s2682
        $region60: #{mamba_forward.1} parent=47 // pred_fallthru
          _
      $region48: #{mamba_forward.1} parent=5 // pred_fallthru
        _
      %p2699 = scmp.le.s32.totalorder 2, %s18
      // Predicated region
      $region61: #{mamba_forward.1} parent=5 // pred_check
        %p2700 = pneg %p2699
      $region62: #{mamba_forward.1} parent=5 // pred_check_branch
        %2702 = sbr.rel (%p2700) target = $region64
      $region63: #{mamba_forward.1} parent=5 // pred_region
        %s2703 = ssub.s32 %s18, 2
        // Predicated region
        $region65: #{mamba_forward.1} parent=63 // pred_check
          %p2704 = pneg %p204
        $region66: #{mamba_forward.1} parent=63 // pred_check_branch
          %2706 = sbr.rel (%p2704) target = $region68
        $region67: #{mamba_forward.1} parent=63 // pred_region
          %s2707 = sand.u32 %s189, 1
          %s2708 = scalar_lea.sflag [#allocation4], %s2707
          %s2709 = sand.u32 %s189, 1
          %s2710 = smul.addr %s2709, 8
          %s2711 = scalar_lea.vmem [#allocation7], %s2710
          %2712 = dma.done %s2708, 128
        $region68: #{mamba_forward.1} parent=63 // pred_fallthru
          _
      $region64: #{mamba_forward.1} parent=5 // pred_fallthru
        _
    $region6: #{mamba_forward.1} parent=1 // loop_footer
      %s22 = sadd.s32 1, %s18
    $region7: #{mamba_forward.1} parent=1 // loop_footer_branch
      %17 = sbr.rel target = $region3
    $region8: #{mamba_forward.1} parent=1 // loop_exit
      _
    %2713 = vsyncpa [#allocation3], 1
    %s2714 = scalar_lea.sflag [#allocation3], 1
    %2715 = vsyncpa %s2714, 1
    %2716 = vsyncpa [#allocation6], 1
    %2717 = vsyncpa [#allocation4], 1
    %s2718 = scalar_lea.sflag [#allocation4], 1
    %2719 = vsyncpa %s2718, 1

</llo_original>
